<compile_context>
chip_gen: v7x
topology: tpu7x:2x2x1
jax: 0.10.0
libtpu: 0.0.40
codegen_flags: <defaults>
</compile_context>

<pallas_src>
import jax
import jax.numpy as jnp
from jax import lax
from jax.experimental import pallas as pl
from jax.experimental.pallas import tpu as pltpu

BN_EPS = 1e-5

_VMEM = pl.BlockSpec(memory_space=pltpu.MemorySpace.VMEM)
_SMEM = pl.BlockSpec(memory_space=pltpu.MemorySpace.SMEM)


# ----------------------------------------------------------------------------
# Fused Pallas kernel: 8 GIN layers + skip accumulation + regressor
# ----------------------------------------------------------------------------
def skip_gin_fused_kernel(x_ref, adj_ref, eps1_ref, w1_ref, b1_ref, w2_ref, b2_ref,
                          wr1_ref, br1_ref, wr2_ref, br2_ref, o_ref):
    """Whole SkipGINNet forward; activations stay resident in VMEM/vregs."""
    x = x_ref[...].astype(jnp.float32)        # (N, H) activations, f32 internally
    adj = adj_ref[...]                        # (N, N) f32, single copy
    skip_acc = jnp.zeros_like(x)
    num_layers = w1_ref.shape[0]

    for l in range(num_layers):               # static unroll over the 8 GIN layers
        # GIN aggregation: A @ x + (1 + eps_l) * x   ((1+eps_l) scalar from SMEM).
        h = jnp.dot(adj, x, preferred_element_type=jnp.float32) + eps1_ref[l] * x
        # MLP hidden Linear (its BatchNorm folded in), then ReLU.  bf16 operands,
        # f32 accumulate (MXU-native).
        h = jnp.dot(h.astype(jnp.bfloat16), w1_ref[l],
                    preferred_element_type=jnp.float32) + b1_ref[l]
        h = jnp.maximum(h, 0.0)
        # MLP output Linear (outer gnn.BatchNorm folded in), then ReLU.
        h = jnp.dot(h.astype(jnp.bfloat16), w2_ref[l],
                    preferred_element_type=jnp.float32) + b2_ref[l]
        x = jnp.maximum(h, 0.0)
        if (l + 1) % 2 == 0:                  # skip1..skip4 = x after layers 2/4/6/8
            skip_acc = skip_acc + x

    # Regressor head.  The 0.25 skip-average and the BN are folded into wr1/br1.
    h = jnp.dot(skip_acc.astype(jnp.bfloat16), wr1_ref[...],
                preferred_element_type=jnp.float32) + br1_ref[...]
    h = jnp.maximum(h, 0.0)
    # Lane-dense (128-wide) output store.
    o_ref[...] = jnp.dot(h.astype(jnp.bfloat16), wr2_ref[...],
                         preferred_element_type=jnp.float32) + br2_ref[...]


@jax.jit
def skip_gin_net_forward(x, adj, eps1, w1_s, b1_s, w2_s, b2_s, wr1, br1, wr2, br2):
    n, h = x.shape
    nl = w1_s.shape[0]
    n_out_pad = wr2.shape[1]
    args = (x, adj, eps1, w1_s, b1_s, w2_s, b2_s, wr1, br1, wr2, br2)
    flops = nl * (2 * n * n * h + 2 * (2 * n * h * h)) \
        + 2 * n * h * h + 2 * n * h * n_out_pad
    bytes_accessed = sum(int(a.size) * a.dtype.itemsize for a in args) \
        + n * n_out_pad * 4
    return pl.pallas_call(
        skip_gin_fused_kernel,
        out_shape=jax.ShapeDtypeStruct((n, n_out_pad), jnp.float32),
        in_specs=[_VMEM, _VMEM, _SMEM] + [_VMEM] * 8,
        out_specs=_VMEM,
        cost_estimate=pl.CostEstimate(flops=flops, transcendentals=0,
                                      bytes_accessed=bytes_accessed),
    )(*args)


# ----------------------------------------------------------------------------
# Host-side parameter folding / packing (exact algebra; eval-mode BN)
# ----------------------------------------------------------------------------
def fold_and_pack_params(layer_params, reg_params, hidden, n_out_pad):
    """Fold eval-mode BatchNorms into adjacent Linears, fold 0.25 skip-average
    into the regressor, stack per-layer weights (no hidden-dim padding), and
    cast MXU operands to bf16."""
    nl = len(layer_params)
    h = hidden

    eps1 = jnp.zeros((nl,), jnp.float32)                  # (1 + eps_l)
    w1_s = jnp.zeros((nl, h, h), jnp.float32)
    b1_s = jnp.zeros((nl, 1, h), jnp.float32)
    w2_s = jnp.zeros((nl, h, h), jnp.float32)
    b2_s = jnp.zeros((nl, 1, h), jnp.float32)

    for l, p in enumerate(layer_params):
        eps1 = eps1.at[l].set(1.0 + p["eps"])
        s1 = p["g1"] * lax.rsqrt(p["v1"] + BN_EPS)
        w1f = p["w1"] * s1[None, :]
        b1f = (p["b1"] - p["m1"]) * s1 + p["be1"]
        s2 = p["g2"] * lax.rsqrt(p["v2"] + BN_EPS)
        w2f = p["w2"] * s2[None, :]
        b2f = (p["b2"] - p["m2"]) * s2 + p["be2"]
        fin = w1f.shape[0]                                # 4 for layer 0, else 32
        w1_s = w1_s.at[l, :fin, :].set(w1f)
        b1_s = b1_s.at[l, 0, :].set(b1f)
        w2_s = w2_s.at[l].set(w2f)
        b2_s = b2_s.at[l, 0, :].set(b2f)

    rp = reg_params
    sr = rp["g"] * lax.rsqrt(rp["v"] + BN_EPS)
    wr1f = 0.25 * rp["w1"] * sr[None, :]                  # skip-average folded in
    br1f = (rp["b1"] - rp["m"]) * sr + rp["be"]
    n_out = rp["w2"].shape[1]
    wr1 = wr1f
    br1 = br1f[None, :]
    wr2 = jnp.zeros((h, n_out_pad), jnp.float32).at[:, :n_out].set(rp["w2"])
    br2 = jnp.zeros((1, n_out_pad), jnp.float32).at[0, :n_out].set(rp["b2"])

    return (eps1,
            w1_s.astype(jnp.bfloat16), b1_s,
            w2_s.astype(jnp.bfloat16), b2_s,
            wr1.astype(jnp.bfloat16), br1,
            wr2.astype(jnp.bfloat16), br2)


# ----------------------------------------------------------------------------
# Pure-JAX reference of the ORIGINAL (unfolded) module semantics
# ----------------------------------------------------------------------------
def reference_forward(x, adj, layer_params, reg_params):
    P = lax.Precision.HIGHEST

    def dot(a, b):
        return jnp.dot(a, b, precision=P)

    h = x
    skips = []
    for p in layer_params:
        z = (1.0 + p["eps"]) * h + dot(adj, h)                 # GINConv aggregation
        z = dot(z, p["w1"]) + p["b1"]                          # MLP hidden Linear
        z = (z - p["m1"]) / jnp.sqrt(p["v1"] + BN_EPS) * p["g1"] + p["be1"]
        z = jnp.maximum(z, 0.0)
        z = dot(z, p["w2"]) + p["b2"]                          # MLP output Linear
        z = (z - p["m2"]) / jnp.sqrt(p["v2"] + BN_EPS) * p["g2"] + p["be2"]
        h = jnp.maximum(z, 0.0)                                # outer BN + relu
        skips.append(h)
    xm = (skips[1] + skips[3] + skips[5] + skips[7]) * 0.25
    rp = reg_params
    z = dot(xm, rp["w1"]) + rp["b1"]
    z = (z - rp["m"]) / jnp.sqrt(rp["v"] + BN_EPS) * rp["g"] + rp["be"]
    z = jnp.maximum(z, 0.0)
    return dot(z, rp["w2"]) + rp["b2"]


# ----------------------------------------------------------------------------
# Deterministic synthetic parameters (original module shapes)
# ----------------------------------------------------------------------------
def init_layer_params(key, fin, hidden):
    ks = jax.random.split(key, 13)
    f32 = jnp.float32
    return dict(
        eps=0.1 * jax.random.normal(ks[12], (), f32),
        w1=jax.random.normal(ks[0], (fin, hidden), f32) / jnp.sqrt(float(fin)),
        b1=0.1 * jax.random.normal(ks[1], (hidden,), f32),
        g1=1.0 + 0.1 * jax.random.normal(ks[2], (hidden,), f32),
        be1=0.1 * jax.random.normal(ks[3], (hidden,), f32),
        m1=0.1 * jax.random.normal(ks[4], (hidden,), f32),
        v1=1.0 + jax.random.uniform(ks[5], (hidden,), f32),
        w2=jax.random.normal(ks[6], (hidden, hidden), f32) / jnp.sqrt(float(hidden)),
        b2=0.1 * jax.random.normal(ks[7], (hidden,), f32),
        g2=1.0 + 0.1 * jax.random.normal(ks[8], (hidden,), f32),
        be2=0.1 * jax.random.normal(ks[9], (hidden,), f32),
        m2=0.1 * jax.random.normal(ks[10], (hidden,), f32),
        v2=1.0 + jax.random.uniform(ks[11], (hidden,), f32),
    )


def init_regressor_params(key, hidden, num_out):
    ks = jax.random.split(key, 8)
    f32 = jnp.float32
    return dict(
        w1=jax.random.normal(ks[0], (hidden, hidden), f32) / jnp.sqrt(float(hidden)),
        b1=0.1 * jax.random.normal(ks[1], (hidden,), f32),
        g=1.0 + 0.1 * jax.random.normal(ks[2], (hidden,), f32),
        be=0.1 * jax.random.normal(ks[3], (hidden,), f32),
        m=0.1 * jax.random.normal(ks[4], (hidden,), f32),
        v=1.0 + jax.random.uniform(ks[5], (hidden,), f32),
        w2=jax.random.normal(ks[6], (hidden, num_out), f32) / jnp.sqrt(float(hidden)),
        b2=0.1 * jax.random.normal(ks[7], (num_out,), f32),
    )


# ----------------------------------------------------------------------------
# Main
# ----------------------------------------------------------------------------
if __name__ == "__main__":
    NUM_LAYER = 8
    N_NODES = 16
    IN_FEATURE = 4
    HIDDEN = 32
    NUM_OUT = 2
    N_OUT_PAD = 128   # lane-dense padded width for the single HBM output store

    key = jax.random.PRNGKey(0)

    # Node features: (N, in_feature)
    x = jax.random.normal(jax.random.fold_in(key, 1000), (N_NODES, IN_FEATURE), jnp.float32)

    # Deterministic undirected graph: ring + chords (edge_index shape (2, E))
    src, dst = [], []
    for i in range(N_NODES):
        for off in (1, 3):
            j = (i + off) % N_NODES
            src += [i, j]
            dst += [j, i]
    edge_index = jnp.array([src, dst], dtype=jnp.int32)

    # Dense adjacency: A[dst, src] = 1  =>  (A @ x)_i = sum_{j -> i} x_j
    adj = jnp.zeros((N_NODES, N_NODES), jnp.float32).at[edge_index[1], edge_index[0]].add(1.0)

    # Parameters (deterministic, synthetic, original module shapes)
    layer_params = []
    fin = IN_FEATURE
    for l in range(NUM_LAYER):
        layer_params.append(init_layer_params(jax.random.fold_in(key, l), fin, HIDDEN))
        fin = HIDDEN
    reg_params = init_regressor_params(jax.random.fold_in(key, 999), HIDDEN, NUM_OUT)

    # Host-side: fold BN + 0.25 skip-average, stack per-layer weights, cast to bf16.
    packed = fold_and_pack_params(layer_params, reg_params, HIDDEN, N_OUT_PAD)
    # Pad node features only up to hidden width (for the uniform per-layer W1 stack).
    x_pad = jnp.zeros((N_NODES, HIDDEN), jnp.float32).at[:, :IN_FEATURE].set(x)
    x_pad = x_pad.astype(jnp.bfloat16)

    # Run the fused kernel.
    out_pad = skip_gin_net_forward(x_pad, adj, *packed)
    out_pad = jax.block_until_ready(out_pad)
    out = out_pad[:, :NUM_OUT]

    # Pure-JAX reference of the original (unfolded) semantics at HIGHEST precision.
    ref = reference_forward(x, adj, layer_params, reg_params)
    scale = float(jnp.maximum(jnp.max(jnp.abs(ref)), 1.0))
    max_err = float(jnp.max(jnp.abs(out - ref)))

    assert out.shape == (N_NODES, NUM_OUT), out.shape
    assert bool(jnp.all(jnp.isfinite(out)))
    # Tolerance at bf16-operand / MXU-default-precision level.
    assert max_err <= 5e-2 * scale, (max_err, scale)
    print("KERNEL_OK")
</pallas_src>

<mosaic_0001>
module attributes {stable_mosaic.version = 11 : i64} {
  func.func @skip_gin_fused_kernel(%arg0: memref<16x32xbf16, #tpu.memory_space<vmem>>, %arg1: memref<16x16xf32, #tpu.memory_space<vmem>>, %arg2: memref<8xf32, #tpu.memory_space<smem>>, %arg3: memref<8x32x32xbf16, #tpu.memory_space<vmem>>, %arg4: memref<8x1x32xf32, #tpu.memory_space<vmem>>, %arg5: memref<8x32x32xbf16, #tpu.memory_space<vmem>>, %arg6: memref<8x1x32xf32, #tpu.memory_space<vmem>>, %arg7: memref<32x32xbf16, #tpu.memory_space<vmem>>, %arg8: memref<1x32xf32, #tpu.memory_space<vmem>>, %arg9: memref<32x128xbf16, #tpu.memory_space<vmem>>, %arg10: memref<1x128xf32, #tpu.memory_space<vmem>>, %arg11: memref<16x128xf32, #tpu.memory_space<vmem>>) attributes {dimension_semantics = [], scalar_prefetch = 0 : i64, scratch_operands = 0 : i64, tpu.core_type = #tpu.core_type<tc>} {
    %c0 = arith.constant 0 : index
    %c0_0 = arith.constant 0 : index
    %0 = vector.load %arg0[%c0, %c0_0] : memref<16x32xbf16, #tpu.memory_space<vmem>>, vector<16x32xbf16>
    %1 = arith.extf %0 : vector<16x32xbf16> to vector<16x32xf32>
    %c0_1 = arith.constant 0 : index
    %c0_2 = arith.constant 0 : index
    %2 = vector.load %arg1[%c0_1, %c0_2] : memref<16x16xf32, #tpu.memory_space<vmem>>, vector<16x16xf32>
    %cst = arith.constant 0.000000e+00 : f32
    %3 = vector.broadcast %cst : f32 to vector<16x32xf32>
    %cst_3 = arith.constant dense<0.000000e+00> : vector<16x32xf32>
    %4 = tpu.matmul %2, %1, %cst_3 {dimension_numbers = #tpu.dot_dimension_numbers<[1], [0], [0], [1], [0, 0, 1, 1], [], []>} : vector<16x16xf32>, vector<16x32xf32>, vector<16x32xf32> -> vector<16x32xf32>
    %c0_4 = arith.constant 0 : index
    %5 = memref.load %arg2[%c0_4] : memref<8xf32, #tpu.memory_space<smem>>
    %6 = vector.broadcast %5 : f32 to vector<16x32xf32>
    %7 = arith.mulf %6, %1 : vector<16x32xf32>
    %8 = arith.addf %4, %7 : vector<16x32xf32>
    %9 = arith.truncf %8 : vector<16x32xf32> to vector<16x32xbf16>
    %c0_5 = arith.constant 0 : index
    %c0_6 = arith.constant 0 : index
    %c0_7 = arith.constant 0 : index
    %10 = vector.load %arg3[%c0_5, %c0_6, %c0_7] : memref<8x32x32xbf16, #tpu.memory_space<vmem>>, vector<1x32x32xbf16>
    %11 = vector.shape_cast %10 : vector<1x32x32xbf16> to vector<32x32xbf16>
    %cst_8 = arith.constant dense<0.000000e+00> : vector<16x32xf32>
    %12 = tpu.matmul %9, %11, %cst_8 {dimension_numbers = #tpu.dot_dimension_numbers<[1], [0], [0], [1], [0, 0, 1, 1], [], []>} : vector<16x32xbf16>, vector<32x32xbf16>, vector<16x32xf32> -> vector<16x32xf32>
    %c0_9 = arith.constant 0 : index
    %c0_10 = arith.constant 0 : index
    %c0_11 = arith.constant 0 : index
    %13 = vector.load %arg4[%c0_9, %c0_10, %c0_11] : memref<8x1x32xf32, #tpu.memory_space<vmem>>, vector<1x1x32xf32>
    %14 = vector.shape_cast %13 : vector<1x1x32xf32> to vector<1x32xf32>
    %15 = vector.broadcast %14 : vector<1x32xf32> to vector<16x32xf32>
    %16 = arith.addf %12, %15 : vector<16x32xf32>
    %cst_12 = arith.constant 0.000000e+00 : f32
    %17 = vector.broadcast %cst_12 : f32 to vector<16x32xf32>
    %18 = arith.maximumf %16, %17 : vector<16x32xf32>
    %19 = arith.truncf %18 : vector<16x32xf32> to vector<16x32xbf16>
    %c0_13 = arith.constant 0 : index
    %c0_14 = arith.constant 0 : index
    %c0_15 = arith.constant 0 : index
    %20 = vector.load %arg5[%c0_13, %c0_14, %c0_15] : memref<8x32x32xbf16, #tpu.memory_space<vmem>>, vector<1x32x32xbf16>
    %21 = vector.shape_cast %20 : vector<1x32x32xbf16> to vector<32x32xbf16>
    %cst_16 = arith.constant dense<0.000000e+00> : vector<16x32xf32>
    %22 = tpu.matmul %19, %21, %cst_16 {dimension_numbers = #tpu.dot_dimension_numbers<[1], [0], [0], [1], [0, 0, 1, 1], [], []>} : vector<16x32xbf16>, vector<32x32xbf16>, vector<16x32xf32> -> vector<16x32xf32>
    %c0_17 = arith.constant 0 : index
    %c0_18 = arith.constant 0 : index
    %c0_19 = arith.constant 0 : index
    %23 = vector.load %arg6[%c0_17, %c0_18, %c0_19] : memref<8x1x32xf32, #tpu.memory_space<vmem>>, vector<1x1x32xf32>
    %24 = vector.shape_cast %23 : vector<1x1x32xf32> to vector<1x32xf32>
    %25 = vector.broadcast %24 : vector<1x32xf32> to vector<16x32xf32>
    %26 = arith.addf %22, %25 : vector<16x32xf32>
    %cst_20 = arith.constant 0.000000e+00 : f32
    %27 = vector.broadcast %cst_20 : f32 to vector<16x32xf32>
    %28 = arith.maximumf %26, %27 : vector<16x32xf32>
    %cst_21 = arith.constant dense<0.000000e+00> : vector<16x32xf32>
    %29 = tpu.matmul %2, %28, %cst_21 {dimension_numbers = #tpu.dot_dimension_numbers<[1], [0], [0], [1], [0, 0, 1, 1], [], []>} : vector<16x16xf32>, vector<16x32xf32>, vector<16x32xf32> -> vector<16x32xf32>
    %c1 = arith.constant 1 : index
    %30 = memref.load %arg2[%c1] : memref<8xf32, #tpu.memory_space<smem>>
    %31 = vector.broadcast %30 : f32 to vector<16x32xf32>
    %32 = arith.mulf %31, %28 : vector<16x32xf32>
    %33 = arith.addf %29, %32 : vector<16x32xf32>
    %34 = arith.truncf %33 : vector<16x32xf32> to vector<16x32xbf16>
    %c1_22 = arith.constant 1 : index
    %c0_23 = arith.constant 0 : index
    %c0_24 = arith.constant 0 : index
    %35 = vector.load %arg3[%c1_22, %c0_23, %c0_24] : memref<8x32x32xbf16, #tpu.memory_space<vmem>>, vector<1x32x32xbf16>
    %36 = vector.shape_cast %35 : vector<1x32x32xbf16> to vector<32x32xbf16>
    %cst_25 = arith.constant dense<0.000000e+00> : vector<16x32xf32>
    %37 = tpu.matmul %34, %36, %cst_25 {dimension_numbers = #tpu.dot_dimension_numbers<[1], [0], [0], [1], [0, 0, 1, 1], [], []>} : vector<16x32xbf16>, vector<32x32xbf16>, vector<16x32xf32> -> vector<16x32xf32>
    %c1_26 = arith.constant 1 : index
    %c0_27 = arith.constant 0 : index
    %c0_28 = arith.constant 0 : index
    %38 = vector.load %arg4[%c1_26, %c0_27, %c0_28] : memref<8x1x32xf32, #tpu.memory_space<vmem>>, vector<1x1x32xf32>
    %39 = vector.shape_cast %38 : vector<1x1x32xf32> to vector<1x32xf32>
    %40 = vector.broadcast %39 : vector<1x32xf32> to vector<16x32xf32>
    %41 = arith.addf %37, %40 : vector<16x32xf32>
    %cst_29 = arith.constant 0.000000e+00 : f32
    %42 = vector.broadcast %cst_29 : f32 to vector<16x32xf32>
    %43 = arith.maximumf %41, %42 : vector<16x32xf32>
    %44 = arith.truncf %43 : vector<16x32xf32> to vector<16x32xbf16>
    %c1_30 = arith.constant 1 : index
    %c0_31 = arith.constant 0 : index
    %c0_32 = arith.constant 0 : index
    %45 = vector.load %arg5[%c1_30, %c0_31, %c0_32] : memref<8x32x32xbf16, #tpu.memory_space<vmem>>, vector<1x32x32xbf16>
    %46 = vector.shape_cast %45 : vector<1x32x32xbf16> to vector<32x32xbf16>
    %cst_33 = arith.constant dense<0.000000e+00> : vector<16x32xf32>
    %47 = tpu.matmul %44, %46, %cst_33 {dimension_numbers = #tpu.dot_dimension_numbers<[1], [0], [0], [1], [0, 0, 1, 1], [], []>} : vector<16x32xbf16>, vector<32x32xbf16>, vector<16x32xf32> -> vector<16x32xf32>
    %c1_34 = arith.constant 1 : index
    %c0_35 = arith.constant 0 : index
    %c0_36 = arith.constant 0 : index
    %48 = vector.load %arg6[%c1_34, %c0_35, %c0_36] : memref<8x1x32xf32, #tpu.memory_space<vmem>>, vector<1x1x32xf32>
    %49 = vector.shape_cast %48 : vector<1x1x32xf32> to vector<1x32xf32>
    %50 = vector.broadcast %49 : vector<1x32xf32> to vector<16x32xf32>
    %51 = arith.addf %47, %50 : vector<16x32xf32>
    %cst_37 = arith.constant 0.000000e+00 : f32
    %52 = vector.broadcast %cst_37 : f32 to vector<16x32xf32>
    %53 = arith.maximumf %51, %52 : vector<16x32xf32>
    %54 = arith.addf %3, %53 : vector<16x32xf32>
    %cst_38 = arith.constant dense<0.000000e+00> : vector<16x32xf32>
    %55 = tpu.matmul %2, %53, %cst_38 {dimension_numbers = #tpu.dot_dimension_numbers<[1], [0], [0], [1], [0, 0, 1, 1], [], []>} : vector<16x16xf32>, vector<16x32xf32>, vector<16x32xf32> -> vector<16x32xf32>
    %c2 = arith.constant 2 : index
    %56 = memref.load %arg2[%c2] : memref<8xf32, #tpu.memory_space<smem>>
    %57 = vector.broadcast %56 : f32 to vector<16x32xf32>
    %58 = arith.mulf %57, %53 : vector<16x32xf32>
    %59 = arith.addf %55, %58 : vector<16x32xf32>
    %60 = arith.truncf %59 : vector<16x32xf32> to vector<16x32xbf16>
    %c2_39 = arith.constant 2 : index
    %c0_40 = arith.constant 0 : index
    %c0_41 = arith.constant 0 : index
    %61 = vector.load %arg3[%c2_39, %c0_40, %c0_41] : memref<8x32x32xbf16, #tpu.memory_space<vmem>>, vector<1x32x32xbf16>
    %62 = vector.shape_cast %61 : vector<1x32x32xbf16> to vector<32x32xbf16>
    %cst_42 = arith.constant dense<0.000000e+00> : vector<16x32xf32>
    %63 = tpu.matmul %60, %62, %cst_42 {dimension_numbers = #tpu.dot_dimension_numbers<[1], [0], [0], [1], [0, 0, 1, 1], [], []>} : vector<16x32xbf16>, vector<32x32xbf16>, vector<16x32xf32> -> vector<16x32xf32>
    %c2_43 = arith.constant 2 : index
    %c0_44 = arith.constant 0 : index
    %c0_45 = arith.constant 0 : index
    %64 = vector.load %arg4[%c2_43, %c0_44, %c0_45] : memref<8x1x32xf32, #tpu.memory_space<vmem>>, vector<1x1x32xf32>
    %65 = vector.shape_cast %64 : vector<1x1x32xf32> to vector<1x32xf32>
    %66 = vector.broadcast %65 : vector<1x32xf32> to vector<16x32xf32>
    %67 = arith.addf %63, %66 : vector<16x32xf32>
    %cst_46 = arith.constant 0.000000e+00 : f32
    %68 = vector.broadcast %cst_46 : f32 to vector<16x32xf32>
    %69 = arith.maximumf %67, %68 : vector<16x32xf32>
    %70 = arith.truncf %69 : vector<16x32xf32> to vector<16x32xbf16>
    %c2_47 = arith.constant 2 : index
    %c0_48 = arith.constant 0 : index
    %c0_49 = arith.constant 0 : index
    %71 = vector.load %arg5[%c2_47, %c0_48, %c0_49] : memref<8x32x32xbf16, #tpu.memory_space<vmem>>, vector<1x32x32xbf16>
    %72 = vector.shape_cast %71 : vector<1x32x32xbf16> to vector<32x32xbf16>
    %cst_50 = arith.constant dense<0.000000e+00> : vector<16x32xf32>
    %73 = tpu.matmul %70, %72, %cst_50 {dimension_numbers = #tpu.dot_dimension_numbers<[1], [0], [0], [1], [0, 0, 1, 1], [], []>} : vector<16x32xbf16>, vector<32x32xbf16>, vector<16x32xf32> -> vector<16x32xf32>
    %c2_51 = arith.constant 2 : index
    %c0_52 = arith.constant 0 : index
    %c0_53 = arith.constant 0 : index
    %74 = vector.load %arg6[%c2_51, %c0_52, %c0_53] : memref<8x1x32xf32, #tpu.memory_space<vmem>>, vector<1x1x32xf32>
    %75 = vector.shape_cast %74 : vector<1x1x32xf32> to vector<1x32xf32>
    %76 = vector.broadcast %75 : vector<1x32xf32> to vector<16x32xf32>
    %77 = arith.addf %73, %76 : vector<16x32xf32>
    %cst_54 = arith.constant 0.000000e+00 : f32
    %78 = vector.broadcast %cst_54 : f32 to vector<16x32xf32>
    %79 = arith.maximumf %77, %78 : vector<16x32xf32>
    %cst_55 = arith.constant dense<0.000000e+00> : vector<16x32xf32>
    %80 = tpu.matmul %2, %79, %cst_55 {dimension_numbers = #tpu.dot_dimension_numbers<[1], [0], [0], [1], [0, 0, 1, 1], [], []>} : vector<16x16xf32>, vector<16x32xf32>, vector<16x32xf32> -> vector<16x32xf32>
    %c3 = arith.constant 3 : index
    %81 = memref.load %arg2[%c3] : memref<8xf32, #tpu.memory_space<smem>>
    %82 = vector.broadcast %81 : f32 to vector<16x32xf32>
    %83 = arith.mulf %82, %79 : vector<16x32xf32>
    %84 = arith.addf %80, %83 : vector<16x32xf32>
    %85 = arith.truncf %84 : vector<16x32xf32> to vector<16x32xbf16>
    %c3_56 = arith.constant 3 : index
    %c0_57 = arith.constant 0 : index
    %c0_58 = arith.constant 0 : index
    %86 = vector.load %arg3[%c3_56, %c0_57, %c0_58] : memref<8x32x32xbf16, #tpu.memory_space<vmem>>, vector<1x32x32xbf16>
    %87 = vector.shape_cast %86 : vector<1x32x32xbf16> to vector<32x32xbf16>
    %cst_59 = arith.constant dense<0.000000e+00> : vector<16x32xf32>
    %88 = tpu.matmul %85, %87, %cst_59 {dimension_numbers = #tpu.dot_dimension_numbers<[1], [0], [0], [1], [0, 0, 1, 1], [], []>} : vector<16x32xbf16>, vector<32x32xbf16>, vector<16x32xf32> -> vector<16x32xf32>
    %c3_60 = arith.constant 3 : index
    %c0_61 = arith.constant 0 : index
    %c0_62 = arith.constant 0 : index
    %89 = vector.load %arg4[%c3_60, %c0_61, %c0_62] : memref<8x1x32xf32, #tpu.memory_space<vmem>>, vector<1x1x32xf32>
    %90 = vector.shape_cast %89 : vector<1x1x32xf32> to vector<1x32xf32>
    %91 = vector.broadcast %90 : vector<1x32xf32> to vector<16x32xf32>
    %92 = arith.addf %88, %91 : vector<16x32xf32>
    %cst_63 = arith.constant 0.000000e+00 : f32
    %93 = vector.broadcast %cst_63 : f32 to vector<16x32xf32>
    %94 = arith.maximumf %92, %93 : vector<16x32xf32>
    %95 = arith.truncf %94 : vector<16x32xf32> to vector<16x32xbf16>
    %c3_64 = arith.constant 3 : index
    %c0_65 = arith.constant 0 : index
    %c0_66 = arith.constant 0 : index
    %96 = vector.load %arg5[%c3_64, %c0_65, %c0_66] : memref<8x32x32xbf16, #tpu.memory_space<vmem>>, vector<1x32x32xbf16>
    %97 = vector.shape_cast %96 : vector<1x32x32xbf16> to vector<32x32xbf16>
    %cst_67 = arith.constant dense<0.000000e+00> : vector<16x32xf32>
    %98 = tpu.matmul %95, %97, %cst_67 {dimension_numbers = #tpu.dot_dimension_numbers<[1], [0], [0], [1], [0, 0, 1, 1], [], []>} : vector<16x32xbf16>, vector<32x32xbf16>, vector<16x32xf32> -> vector<16x32xf32>
    %c3_68 = arith.constant 3 : index
    %c0_69 = arith.constant 0 : index
    %c0_70 = arith.constant 0 : index
    %99 = vector.load %arg6[%c3_68, %c0_69, %c0_70] : memref<8x1x32xf32, #tpu.memory_space<vmem>>, vector<1x1x32xf32>
    %100 = vector.shape_cast %99 : vector<1x1x32xf32> to vector<1x32xf32>
    %101 = vector.broadcast %100 : vector<1x32xf32> to vector<16x32xf32>
    %102 = arith.addf %98, %101 : vector<16x32xf32>
    %cst_71 = arith.constant 0.000000e+00 : f32
    %103 = vector.broadcast %cst_71 : f32 to vector<16x32xf32>
    %104 = arith.maximumf %102, %103 : vector<16x32xf32>
    %105 = arith.addf %54, %104 : vector<16x32xf32>
    %cst_72 = arith.constant dense<0.000000e+00> : vector<16x32xf32>
    %106 = tpu.matmul %2, %104, %cst_72 {dimension_numbers = #tpu.dot_dimension_numbers<[1], [0], [0], [1], [0, 0, 1, 1], [], []>} : vector<16x16xf32>, vector<16x32xf32>, vector<16x32xf32> -> vector<16x32xf32>
    %c4 = arith.constant 4 : index
    %107 = memref.load %arg2[%c4] : memref<8xf32, #tpu.memory_space<smem>>
    %108 = vector.broadcast %107 : f32 to vector<16x32xf32>
    %109 = arith.mulf %108, %104 : vector<16x32xf32>
    %110 = arith.addf %106, %109 : vector<16x32xf32>
    %111 = arith.truncf %110 : vector<16x32xf32> to vector<16x32xbf16>
    %c4_73 = arith.constant 4 : index
    %c0_74 = arith.constant 0 : index
    %c0_75 = arith.constant 0 : index
    %112 = vector.load %arg3[%c4_73, %c0_74, %c0_75] : memref<8x32x32xbf16, #tpu.memory_space<vmem>>, vector<1x32x32xbf16>
    %113 = vector.shape_cast %112 : vector<1x32x32xbf16> to vector<32x32xbf16>
    %cst_76 = arith.constant dense<0.000000e+00> : vector<16x32xf32>
    %114 = tpu.matmul %111, %113, %cst_76 {dimension_numbers = #tpu.dot_dimension_numbers<[1], [0], [0], [1], [0, 0, 1, 1], [], []>} : vector<16x32xbf16>, vector<32x32xbf16>, vector<16x32xf32> -> vector<16x32xf32>
    %c4_77 = arith.constant 4 : index
    %c0_78 = arith.constant 0 : index
    %c0_79 = arith.constant 0 : index
    %115 = vector.load %arg4[%c4_77, %c0_78, %c0_79] : memref<8x1x32xf32, #tpu.memory_space<vmem>>, vector<1x1x32xf32>
    %116 = vector.shape_cast %115 : vector<1x1x32xf32> to vector<1x32xf32>
    %117 = vector.broadcast %116 : vector<1x32xf32> to vector<16x32xf32>
    %118 = arith.addf %114, %117 : vector<16x32xf32>
    %cst_80 = arith.constant 0.000000e+00 : f32
    %119 = vector.broadcast %cst_80 : f32 to vector<16x32xf32>
    %120 = arith.maximumf %118, %119 : vector<16x32xf32>
    %121 = arith.truncf %120 : vector<16x32xf32> to vector<16x32xbf16>
    %c4_81 = arith.constant 4 : index
    %c0_82 = arith.constant 0 : index
    %c0_83 = arith.constant 0 : index
    %122 = vector.load %arg5[%c4_81, %c0_82, %c0_83] : memref<8x32x32xbf16, #tpu.memory_space<vmem>>, vector<1x32x32xbf16>
    %123 = vector.shape_cast %122 : vector<1x32x32xbf16> to vector<32x32xbf16>
    %cst_84 = arith.constant dense<0.000000e+00> : vector<16x32xf32>
    %124 = tpu.matmul %121, %123, %cst_84 {dimension_numbers = #tpu.dot_dimension_numbers<[1], [0], [0], [1], [0, 0, 1, 1], [], []>} : vector<16x32xbf16>, vector<32x32xbf16>, vector<16x32xf32> -> vector<16x32xf32>
    %c4_85 = arith.constant 4 : index
    %c0_86 = arith.constant 0 : index
    %c0_87 = arith.constant 0 : index
    %125 = vector.load %arg6[%c4_85, %c0_86, %c0_87] : memref<8x1x32xf32, #tpu.memory_space<vmem>>, vector<1x1x32xf32>
    %126 = vector.shape_cast %125 : vector<1x1x32xf32> to vector<1x32xf32>
    %127 = vector.broadcast %126 : vector<1x32xf32> to vector<16x32xf32>
    %128 = arith.addf %124, %127 : vector<16x32xf32>
    %cst_88 = arith.constant 0.000000e+00 : f32
    %129 = vector.broadcast %cst_88 : f32 to vector<16x32xf32>
    %130 = arith.maximumf %128, %129 : vector<16x32xf32>
    %cst_89 = arith.constant dense<0.000000e+00> : vector<16x32xf32>
    %131 = tpu.matmul %2, %130, %cst_89 {dimension_numbers = #tpu.dot_dimension_numbers<[1], [0], [0], [1], [0, 0, 1, 1], [], []>} : vector<16x16xf32>, vector<16x32xf32>, vector<16x32xf32> -> vector<16x32xf32>
    %c5 = arith.constant 5 : index
    %132 = memref.load %arg2[%c5] : memref<8xf32, #tpu.memory_space<smem>>
    %133 = vector.broadcast %132 : f32 to vector<16x32xf32>
    %134 = arith.mulf %133, %130 : vector<16x32xf32>
    %135 = arith.addf %131, %134 : vector<16x32xf32>
    %136 = arith.truncf %135 : vector<16x32xf32> to vector<16x32xbf16>
    %c5_90 = arith.constant 5 : index
    %c0_91 = arith.constant 0 : index
    %c0_92 = arith.constant 0 : index
    %137 = vector.load %arg3[%c5_90, %c0_91, %c0_92] : memref<8x32x32xbf16, #tpu.memory_space<vmem>>, vector<1x32x32xbf16>
    %138 = vector.shape_cast %137 : vector<1x32x32xbf16> to vector<32x32xbf16>
    %cst_93 = arith.constant dense<0.000000e+00> : vector<16x32xf32>
    %139 = tpu.matmul %136, %138, %cst_93 {dimension_numbers = #tpu.dot_dimension_numbers<[1], [0], [0], [1], [0, 0, 1, 1], [], []>} : vector<16x32xbf16>, vector<32x32xbf16>, vector<16x32xf32> -> vector<16x32xf32>
    %c5_94 = arith.constant 5 : index
    %c0_95 = arith.constant 0 : index
    %c0_96 = arith.constant 0 : index
    %140 = vector.load %arg4[%c5_94, %c0_95, %c0_96] : memref<8x1x32xf32, #tpu.memory_space<vmem>>, vector<1x1x32xf32>
    %141 = vector.shape_cast %140 : vector<1x1x32xf32> to vector<1x32xf32>
    %142 = vector.broadcast %141 : vector<1x32xf32> to vector<16x32xf32>
    %143 = arith.addf %139, %142 : vector<16x32xf32>
    %cst_97 = arith.constant 0.000000e+00 : f32
    %144 = vector.broadcast %cst_97 : f32 to vector<16x32xf32>
    %145 = arith.maximumf %143, %144 : vector<16x32xf32>
    %146 = arith.truncf %145 : vector<16x32xf32> to vector<16x32xbf16>
    %c5_98 = arith.constant 5 : index
    %c0_99 = arith.constant 0 : index
    %c0_100 = arith.constant 0 : index
    %147 = vector.load %arg5[%c5_98, %c0_99, %c0_100] : memref<8x32x32xbf16, #tpu.memory_space<vmem>>, vector<1x32x32xbf16>
    %148 = vector.shape_cast %147 : vector<1x32x32xbf16> to vector<32x32xbf16>
    %cst_101 = arith.constant dense<0.000000e+00> : vector<16x32xf32>
    %149 = tpu.matmul %146, %148, %cst_101 {dimension_numbers = #tpu.dot_dimension_numbers<[1], [0], [0], [1], [0, 0, 1, 1], [], []>} : vector<16x32xbf16>, vector<32x32xbf16>, vector<16x32xf32> -> vector<16x32xf32>
    %c5_102 = arith.constant 5 : index
    %c0_103 = arith.constant 0 : index
    %c0_104 = arith.constant 0 : index
    %150 = vector.load %arg6[%c5_102, %c0_103, %c0_104] : memref<8x1x32xf32, #tpu.memory_space<vmem>>, vector<1x1x32xf32>
    %151 = vector.shape_cast %150 : vector<1x1x32xf32> to vector<1x32xf32>
    %152 = vector.broadcast %151 : vector<1x32xf32> to vector<16x32xf32>
    %153 = arith.addf %149, %152 : vector<16x32xf32>
    %cst_105 = arith.constant 0.000000e+00 : f32
    %154 = vector.broadcast %cst_105 : f32 to vector<16x32xf32>
    %155 = arith.maximumf %153, %154 : vector<16x32xf32>
    %156 = arith.addf %105, %155 : vector<16x32xf32>
    %cst_106 = arith.constant dense<0.000000e+00> : vector<16x32xf32>
    %157 = tpu.matmul %2, %155, %cst_106 {dimension_numbers = #tpu.dot_dimension_numbers<[1], [0], [0], [1], [0, 0, 1, 1], [], []>} : vector<16x16xf32>, vector<16x32xf32>, vector<16x32xf32> -> vector<16x32xf32>
    %c6 = arith.constant 6 : index
    %158 = memref.load %arg2[%c6] : memref<8xf32, #tpu.memory_space<smem>>
    %159 = vector.broadcast %158 : f32 to vector<16x32xf32>
    %160 = arith.mulf %159, %155 : vector<16x32xf32>
    %161 = arith.addf %157, %160 : vector<16x32xf32>
    %162 = arith.truncf %161 : vector<16x32xf32> to vector<16x32xbf16>
    %c6_107 = arith.constant 6 : index
    %c0_108 = arith.constant 0 : index
    %c0_109 = arith.constant 0 : index
    %163 = vector.load %arg3[%c6_107, %c0_108, %c0_109] : memref<8x32x32xbf16, #tpu.memory_space<vmem>>, vector<1x32x32xbf16>
    %164 = vector.shape_cast %163 : vector<1x32x32xbf16> to vector<32x32xbf16>
    %cst_110 = arith.constant dense<0.000000e+00> : vector<16x32xf32>
    %165 = tpu.matmul %162, %164, %cst_110 {dimension_numbers = #tpu.dot_dimension_numbers<[1], [0], [0], [1], [0, 0, 1, 1], [], []>} : vector<16x32xbf16>, vector<32x32xbf16>, vector<16x32xf32> -> vector<16x32xf32>
    %c6_111 = arith.constant 6 : index
    %c0_112 = arith.constant 0 : index
    %c0_113 = arith.constant 0 : index
    %166 = vector.load %arg4[%c6_111, %c0_112, %c0_113] : memref<8x1x32xf32, #tpu.memory_space<vmem>>, vector<1x1x32xf32>
    %167 = vector.shape_cast %166 : vector<1x1x32xf32> to vector<1x32xf32>
    %168 = vector.broadcast %167 : vector<1x32xf32> to vector<16x32xf32>
    %169 = arith.addf %165, %168 : vector<16x32xf32>
    %cst_114 = arith.constant 0.000000e+00 : f32
    %170 = vector.broadcast %cst_114 : f32 to vector<16x32xf32>
    %171 = arith.maximumf %169, %170 : vector<16x32xf32>
    %172 = arith.truncf %171 : vector<16x32xf32> to vector<16x32xbf16>
    %c6_115 = arith.constant 6 : index
    %c0_116 = arith.constant 0 : index
    %c0_117 = arith.constant 0 : index
    %173 = vector.load %arg5[%c6_115, %c0_116, %c0_117] : memref<8x32x32xbf16, #tpu.memory_space<vmem>>, vector<1x32x32xbf16>
    %174 = vector.shape_cast %173 : vector<1x32x32xbf16> to vector<32x32xbf16>
    %cst_118 = arith.constant dense<0.000000e+00> : vector<16x32xf32>
    %175 = tpu.matmul %172, %174, %cst_118 {dimension_numbers = #tpu.dot_dimension_numbers<[1], [0], [0], [1], [0, 0, 1, 1], [], []>} : vector<16x32xbf16>, vector<32x32xbf16>, vector<16x32xf32> -> vector<16x32xf32>
    %c6_119 = arith.constant 6 : index
    %c0_120 = arith.constant 0 : index
    %c0_121 = arith.constant 0 : index
    %176 = vector.load %arg6[%c6_119, %c0_120, %c0_121] : memref<8x1x32xf32, #tpu.memory_space<vmem>>, vector<1x1x32xf32>
    %177 = vector.shape_cast %176 : vector<1x1x32xf32> to vector<1x32xf32>
    %178 = vector.broadcast %177 : vector<1x32xf32> to vector<16x32xf32>
    %179 = arith.addf %175, %178 : vector<16x32xf32>
    %cst_122 = arith.constant 0.000000e+00 : f32
    %180 = vector.broadcast %cst_122 : f32 to vector<16x32xf32>
    %181 = arith.maximumf %179, %180 : vector<16x32xf32>
    %cst_123 = arith.constant dense<0.000000e+00> : vector<16x32xf32>
    %182 = tpu.matmul %2, %181, %cst_123 {dimension_numbers = #tpu.dot_dimension_numbers<[1], [0], [0], [1], [0, 0, 1, 1], [], []>} : vector<16x16xf32>, vector<16x32xf32>, vector<16x32xf32> -> vector<16x32xf32>
    %c7 = arith.constant 7 : index
    %183 = memref.load %arg2[%c7] : memref<8xf32, #tpu.memory_space<smem>>
    %184 = vector.broadcast %183 : f32 to vector<16x32xf32>
    %185 = arith.mulf %184, %181 : vector<16x32xf32>
    %186 = arith.addf %182, %185 : vector<16x32xf32>
    %187 = arith.truncf %186 : vector<16x32xf32> to vector<16x32xbf16>
    %c7_124 = arith.constant 7 : index
    %c0_125 = arith.constant 0 : index
    %c0_126 = arith.constant 0 : index
    %188 = vector.load %arg3[%c7_124, %c0_125, %c0_126] : memref<8x32x32xbf16, #tpu.memory_space<vmem>>, vector<1x32x32xbf16>
    %189 = vector.shape_cast %188 : vector<1x32x32xbf16> to vector<32x32xbf16>
    %cst_127 = arith.constant dense<0.000000e+00> : vector<16x32xf32>
    %190 = tpu.matmul %187, %189, %cst_127 {dimension_numbers = #tpu.dot_dimension_numbers<[1], [0], [0], [1], [0, 0, 1, 1], [], []>} : vector<16x32xbf16>, vector<32x32xbf16>, vector<16x32xf32> -> vector<16x32xf32>
    %c7_128 = arith.constant 7 : index
    %c0_129 = arith.constant 0 : index
    %c0_130 = arith.constant 0 : index
    %191 = vector.load %arg4[%c7_128, %c0_129, %c0_130] : memref<8x1x32xf32, #tpu.memory_space<vmem>>, vector<1x1x32xf32>
    %192 = vector.shape_cast %191 : vector<1x1x32xf32> to vector<1x32xf32>
    %193 = vector.broadcast %192 : vector<1x32xf32> to vector<16x32xf32>
    %194 = arith.addf %190, %193 : vector<16x32xf32>
    %cst_131 = arith.constant 0.000000e+00 : f32
    %195 = vector.broadcast %cst_131 : f32 to vector<16x32xf32>
    %196 = arith.maximumf %194, %195 : vector<16x32xf32>
    %197 = arith.truncf %196 : vector<16x32xf32> to vector<16x32xbf16>
    %c7_132 = arith.constant 7 : index
    %c0_133 = arith.constant 0 : index
    %c0_134 = arith.constant 0 : index
    %198 = vector.load %arg5[%c7_132, %c0_133, %c0_134] : memref<8x32x32xbf16, #tpu.memory_space<vmem>>, vector<1x32x32xbf16>
    %199 = vector.shape_cast %198 : vector<1x32x32xbf16> to vector<32x32xbf16>
    %cst_135 = arith.constant dense<0.000000e+00> : vector<16x32xf32>
    %200 = tpu.matmul %197, %199, %cst_135 {dimension_numbers = #tpu.dot_dimension_numbers<[1], [0], [0], [1], [0, 0, 1, 1], [], []>} : vector<16x32xbf16>, vector<32x32xbf16>, vector<16x32xf32> -> vector<16x32xf32>
    %c7_136 = arith.constant 7 : index
    %c0_137 = arith.constant 0 : index
    %c0_138 = arith.constant 0 : index
    %201 = vector.load %arg6[%c7_136, %c0_137, %c0_138] : memref<8x1x32xf32, #tpu.memory_space<vmem>>, vector<1x1x32xf32>
    %202 = vector.shape_cast %201 : vector<1x1x32xf32> to vector<1x32xf32>
    %203 = vector.broadcast %202 : vector<1x32xf32> to vector<16x32xf32>
    %204 = arith.addf %200, %203 : vector<16x32xf32>
    %cst_139 = arith.constant 0.000000e+00 : f32
    %205 = vector.broadcast %cst_139 : f32 to vector<16x32xf32>
    %206 = arith.maximumf %204, %205 : vector<16x32xf32>
    %207 = arith.addf %156, %206 : vector<16x32xf32>
    %208 = arith.truncf %207 : vector<16x32xf32> to vector<16x32xbf16>
    %c0_140 = arith.constant 0 : index
    %c0_141 = arith.constant 0 : index
    %209 = vector.load %arg7[%c0_140, %c0_141] : memref<32x32xbf16, #tpu.memory_space<vmem>>, vector<32x32xbf16>
    %cst_142 = arith.constant dense<0.000000e+00> : vector<16x32xf32>
    %210 = tpu.matmul %208, %209, %cst_142 {dimension_numbers = #tpu.dot_dimension_numbers<[1], [0], [0], [1], [0, 0, 1, 1], [], []>} : vector<16x32xbf16>, vector<32x32xbf16>, vector<16x32xf32> -> vector<16x32xf32>
    %c0_143 = arith.constant 0 : index
    %c0_144 = arith.constant 0 : index
    %211 = vector.load %arg8[%c0_143, %c0_144] : memref<1x32xf32, #tpu.memory_space<vmem>>, vector<1x32xf32>
    %212 = vector.broadcast %211 : vector<1x32xf32> to vector<16x32xf32>
    %213 = arith.addf %210, %212 : vector<16x32xf32>
    %cst_145 = arith.constant 0.000000e+00 : f32
    %214 = vector.broadcast %cst_145 : f32 to vector<16x32xf32>
    %215 = arith.maximumf %213, %214 : vector<16x32xf32>
    %216 = arith.truncf %215 : vector<16x32xf32> to vector<16x32xbf16>
    %c0_146 = arith.constant 0 : index
    %c0_147 = arith.constant 0 : index
    %217 = vector.load %arg9[%c0_146, %c0_147] : memref<32x128xbf16, #tpu.memory_space<vmem>>, vector<32x128xbf16>
    %cst_148 = arith.constant dense<0.000000e+00> : vector<16x128xf32>
    %218 = tpu.matmul %216, %217, %cst_148 {dimension_numbers = #tpu.dot_dimension_numbers<[1], [0], [0], [1], [0, 0, 1, 1], [], []>} : vector<16x32xbf16>, vector<32x128xbf16>, vector<16x128xf32> -> vector<16x128xf32>
    %c0_149 = arith.constant 0 : index
    %c0_150 = arith.constant 0 : index
    %219 = vector.load %arg10[%c0_149, %c0_150] : memref<1x128xf32, #tpu.memory_space<vmem>>, vector<1x128xf32>
    %220 = vector.broadcast %219 : vector<1x128xf32> to vector<16x128xf32>
    %221 = arith.addf %218, %220 : vector<16x128xf32>
    %c0_151 = arith.constant 0 : index
    %c0_152 = arith.constant 0 : index
    %222 = vector.load %arg11[%c0_151, %c0_152] : memref<16x128xf32, #tpu.memory_space<vmem>>, vector<16x128xf32>
    tpu.vector_store %arg11[%c0_151, %c0_152], %221 {strides = array<i32>} : memref<16x128xf32, #tpu.memory_space<vmem>>, vector<16x128xf32>,
    return
  }
}

</mosaic_0001>

<llo_original>
// kernel: skip_gin_net_forward.1
$region0: #{skip_gin_net_forward.1}
  #allocation0 [shape = 'u32[]', space=smem, size = 0x4, offset = 0x4, fixed_abs, tag = 'smem constant byte address 0x4 - core index']
  #allocation1 [shape = 'u32[144,128]{1,0:T(1,128)}', space=vmem, size = 0x12000, scoped, tag = 'internal scratch']
  %s0 = inlined_call_operand.hbm [shape: bf16[16,32], index: 0, kind: input, shape index: {}]
  %s1 = inlined_call_operand.hbm [shape: f32[16,16], index: 1, kind: input, shape index: {}]
  %s2 = inlined_call_operand.vmem [shape: f32[8], index: 2, kind: input, shape index: {}]
  %s3 = inlined_call_operand.hbm [shape: bf16[8,32,32], index: 3, kind: input, shape index: {}]
  %s4 = inlined_call_operand.hbm [shape: f32[8,1,32], index: 4, kind: input, shape index: {}]
  %s5 = inlined_call_operand.hbm [shape: bf16[8,32,32], index: 5, kind: input, shape index: {}]
  %s6 = inlined_call_operand.hbm [shape: f32[8,1,32], index: 6, kind: input, shape index: {}]
  %s7 = inlined_call_operand.vmem [shape: bf16[32,32], index: 7, kind: input, shape index: {}]
  %s8 = inlined_call_operand.vmem [shape: f32[1,32], index: 8, kind: input, shape index: {}]
  %s9 = inlined_call_operand.vmem [shape: bf16[32,128], index: 9, kind: input, shape index: {}]
  %s10 = inlined_call_operand.vmem [shape: f32[1,128], index: 10, kind: input, shape index: {}]
  %s11 = inlined_call_operand.hbm [shape: f32[16,128], index: 11, kind: output, shape index: {}]
  %s12 = sld [smem:[#allocation0]]
  $region82: #{skip_gin_net_forward.1} parent=0
    _
  %s14 = ssub.s32 1, %s12
  %s15 = scalar_select 0, %s14, %s12
  $region1: #{skip_gin_net_forward.1} parent=0
    #allocation2 [shape = 'u8[4096]{0}', space=vmem, size = 0x1000, scoped, tag = 'input window, operand 0, single buffered']
    #allocation3 [shape = 's32[1]{0}', space=sflag, size = 0x4, scoped, tag = 'scoped memory for skip_gin_net_forward.1']
    #allocation4 [shape = 's32[1]{0}', space=sflag, size = 0x4, scoped, tag = 'scoped memory for skip_gin_net_forward.1']
    #allocation5 [shape = 's32[1]{0}', space=sflag, size = 0x4, scoped, tag = 'scoped memory for skip_gin_net_forward.1']
    #allocation6 [shape = 'u8[8192]{0}', space=vmem, size = 0x2000, scoped, tag = 'input window, operand 1, single buffered']
    #allocation7 [shape = 's32[1]{0}', space=sflag, size = 0x4, scoped, tag = 'scoped memory for skip_gin_net_forward.1']
    #allocation8 [shape = 'u8[512]{0}', space=smem, size = 0x200, scoped, tag = 'input window, operand 2, single buffered']
    #allocation9 [shape = 'u8[65536]{0}', space=vmem, size = 0x10000, scoped, tag = 'input window, operand 3, single buffered']
    #allocation10 [shape = 'u8[4096]{0}', space=vmem, size = 0x1000, scoped, tag = 'input window, operand 4, single buffered']
    #allocation11 [shape = 's32[1]{0}', space=sflag, size = 0x4, scoped, tag = 'scoped memory for skip_gin_net_forward.1']
    #allocation12 [shape = 'u8[65536]{0}', space=vmem, size = 0x10000, scoped, tag = 'input window, operand 5, single buffered']
    #allocation13 [shape = 'u8[4096]{0}', space=vmem, size = 0x1000, scoped, tag = 'input window, operand 6, single buffered']
    #allocation14 [shape = 's32[1]{0}', space=sflag, size = 0x4, scoped, tag = 'scoped memory for skip_gin_net_forward.1']
    #allocation15 [shape = 'u8[8192]{0}', space=vmem, size = 0x2000, scoped, tag = 'output window, operand 0, single buffered']
    %16 = vsyncpa [#allocation3], 0
    %17 = vsyncpa [#allocation7], 0
    %18 = vsyncpa [#allocation5], 0
    %19 = vsyncpa [#allocation11], 0
    %20 = vsyncpa [#allocation14], 0
    %21 = vsyncpa [#allocation4], 0
    // Predicated region
    $region2: #{skip_gin_net_forward.1} parent=1 // pred_check
      _
    $region3: #{skip_gin_net_forward.1} parent=1 // pred_check_branch
      %23 = sbr.rel (0) target = $region5
    $region4: #{skip_gin_net_forward.1} parent=1 // pred_region
      %s25 = ssub.s32 128, 128
      %26 = vsyncadd [#allocation3], %s25
      %s27 = sshll.u32 [#allocation2], 4
      %s28 = int_to_ptr.vmem [resolvable:$true] %s27
      %33 = dma.hbm_to_vmem [thread:$0]  %s0, 128, %s28, [#allocation3], 64, 64, 4
    $region5: #{skip_gin_net_forward.1} parent=1 // pred_fallthru
      _
    // Predicated region
    $region6: #{skip_gin_net_forward.1} parent=1 // pred_check
      _
    $region7: #{skip_gin_net_forward.1} parent=1 // pred_check_branch
      %35 = sbr.rel (0) target = $region9
    $region8: #{skip_gin_net_forward.1} parent=1 // pred_region
      %s37 = ssub.s32 256, 256
      %38 = vsyncadd [#allocation7], %s37
      %s39 = sshll.u32 [#allocation6], 4
      %s40 = int_to_ptr.vmem [resolvable:$true] %s39
      %45 = dma.hbm_to_vmem [thread:$0]  %s1, 256, %s40, [#allocation7], 128, 128, 8
    $region9: #{skip_gin_net_forward.1} parent=1 // pred_fallthru
      _
    // Predicated region
    $region10: #{skip_gin_net_forward.1} parent=1 // pred_check
      _
    $region11: #{skip_gin_net_forward.1} parent=1 // pred_check_branch
      %47 = sbr.rel (0) target = $region13
    $region12: #{skip_gin_net_forward.1} parent=1 // pred_region
      %s49 = ssub.s32 16, 16
      %50 = vsyncadd [#allocation5], %s49
      %s52 = sshll.u32 %s2, 4
      %s53 = int_to_ptr.vmem [resolvable:$true] %s52
      %55 = dma.vmem_to_smem %s53, 16, [#allocation8], [#allocation5]
    $region13: #{skip_gin_net_forward.1} parent=1 // pred_fallthru
      _
    // Predicated region
    $region14: #{skip_gin_net_forward.1} parent=1 // pred_check
      _
    $region15: #{skip_gin_net_forward.1} parent=1 // pred_check_branch
      %57 = sbr.rel (0) target = $region17
    $region16: #{skip_gin_net_forward.1} parent=1 // pred_region
      %s59 = ssub.s32 2048, 2048
      %60 = vsyncadd [#allocation7], %s59
      %s61 = sshll.u32 [#allocation9], 4
      %s62 = int_to_ptr.vmem [resolvable:$true] %s61
      %67 = dma.hbm_to_vmem [thread:$0]  %s3, 2048, %s62, [#allocation7], 64, 64, 4
    $region17: #{skip_gin_net_forward.1} parent=1 // pred_fallthru
      _
    // Predicated region
    $region18: #{skip_gin_net_forward.1} parent=1 // pred_check
      _
    $region19: #{skip_gin_net_forward.1} parent=1 // pred_check_branch
      %69 = sbr.rel (0) target = $region21
    $region20: #{skip_gin_net_forward.1} parent=1 // pred_region
      %s71 = ssub.s32 128, 128
      %72 = vsyncadd [#allocation11], %s71
      %s73 = sshll.u32 [#allocation10], 4
      %s74 = int_to_ptr.vmem [resolvable:$true] %s73
      %79 = dma.hbm_to_vmem [thread:$0]  %s4, 128, %s74, [#allocation11], 16, 16, 1
    $region21: #{skip_gin_net_forward.1} parent=1 // pred_fallthru
      _
    // Predicated region
    $region22: #{skip_gin_net_forward.1} parent=1 // pred_check
      _
    $region23: #{skip_gin_net_forward.1} parent=1 // pred_check_branch
      %81 = sbr.rel (0) target = $region25
    $region24: #{skip_gin_net_forward.1} parent=1 // pred_region
      %s83 = ssub.s32 2048, 2048
      %84 = vsyncadd [#allocation11], %s83
      %s85 = sshll.u32 [#allocation12], 4
      %s86 = int_to_ptr.vmem [resolvable:$true] %s85
      %91 = dma.hbm_to_vmem [thread:$0]  %s5, 2048, %s86, [#allocation11], 64, 64, 4
    $region25: #{skip_gin_net_forward.1} parent=1 // pred_fallthru
      _
    // Predicated region
    $region26: #{skip_gin_net_forward.1} parent=1 // pred_check
      _
    $region27: #{skip_gin_net_forward.1} parent=1 // pred_check_branch
      %93 = sbr.rel (0) target = $region29
    $region28: #{skip_gin_net_forward.1} parent=1 // pred_region
      %s95 = ssub.s32 128, 128
      %96 = vsyncadd [#allocation14], %s95
      %s97 = sshll.u32 [#allocation13], 4
      %s98 = int_to_ptr.vmem [resolvable:$true] %s97
      %103 = dma.hbm_to_vmem [thread:$0]  %s6, 128, %s98, [#allocation14], 16, 16, 1
    $region29: #{skip_gin_net_forward.1} parent=1 // pred_fallthru
      _
    // Predicated region
    $region30: #{skip_gin_net_forward.1} parent=1 // pred_check
      _
    $region31: #{skip_gin_net_forward.1} parent=1 // pred_check_branch
      %105 = sbr.rel (0) target = $region33
    $region32: #{skip_gin_net_forward.1} parent=1 // pred_region
      _
    $region33: #{skip_gin_net_forward.1} parent=1 // pred_fallthru
      _
    // Predicated region
    $region34: #{skip_gin_net_forward.1} parent=1 // pred_check
      _
    $region35: #{skip_gin_net_forward.1} parent=1 // pred_check_branch
      %107 = sbr.rel (0) target = $region37
    $region36: #{skip_gin_net_forward.1} parent=1 // pred_region
      _
    $region37: #{skip_gin_net_forward.1} parent=1 // pred_fallthru
      _
    // Predicated region
    $region38: #{skip_gin_net_forward.1} parent=1 // pred_check
      _
    $region39: #{skip_gin_net_forward.1} parent=1 // pred_check_branch
      %109 = sbr.rel (0) target = $region41
    $region40: #{skip_gin_net_forward.1} parent=1 // pred_region
      _
    $region41: #{skip_gin_net_forward.1} parent=1 // pred_fallthru
      _
    // Predicated region
    $region42: #{skip_gin_net_forward.1} parent=1 // pred_check
      _
    $region43: #{skip_gin_net_forward.1} parent=1 // pred_check_branch
      %111 = sbr.rel (0) target = $region45
    $region44: #{skip_gin_net_forward.1} parent=1 // pred_region
      _
    $region45: #{skip_gin_net_forward.1} parent=1 // pred_fallthru
      _
    // Predicated region
    $region46: #{skip_gin_net_forward.1} parent=1 // pred_check
      _
    $region47: #{skip_gin_net_forward.1} parent=1 // pred_check_branch
      %113 = sbr.rel (0) target = $region49
    $region48: #{skip_gin_net_forward.1} parent=1 // pred_region
      %114 = dma.done [#allocation3], 128
    $region49: #{skip_gin_net_forward.1} parent=1 // pred_fallthru
      _
    // Predicated region
    $region50: #{skip_gin_net_forward.1} parent=1 // pred_check
      _
    $region51: #{skip_gin_net_forward.1} parent=1 // pred_check_branch
      %116 = sbr.rel (0) target = $region53
    $region52: #{skip_gin_net_forward.1} parent=1 // pred_region
      %117 = dma.done [#allocation7], 256
    $region53: #{skip_gin_net_forward.1} parent=1 // pred_fallthru
      _
    // Predicated region
    $region54: #{skip_gin_net_forward.1} parent=1 // pred_check
      _
    $region55: #{skip_gin_net_forward.1} parent=1 // pred_check_branch
      %119 = sbr.rel (0) target = $region57
    $region56: #{skip_gin_net_forward.1} parent=1 // pred_region
      %120 = dma.done [#allocation5], 16
    $region57: #{skip_gin_net_forward.1} parent=1 // pred_fallthru
      _
    // Predicated region
    $region58: #{skip_gin_net_forward.1} parent=1 // pred_check
      _
    $region59: #{skip_gin_net_forward.1} parent=1 // pred_check_branch
      %122 = sbr.rel (0) target = $region61
    $region60: #{skip_gin_net_forward.1} parent=1 // pred_region
      %123 = dma.done [#allocation7], 2048
    $region61: #{skip_gin_net_forward.1} parent=1 // pred_fallthru
      _
    // Predicated region
    $region62: #{skip_gin_net_forward.1} parent=1 // pred_check
      _
    $region63: #{skip_gin_net_forward.1} parent=1 // pred_check_branch
      %125 = sbr.rel (0) target = $region65
    $region64: #{skip_gin_net_forward.1} parent=1 // pred_region
      %126 = dma.done [#allocation11], 128
    $region65: #{skip_gin_net_forward.1} parent=1 // pred_fallthru
      _
    // Predicated region
    $region66: #{skip_gin_net_forward.1} parent=1 // pred_check
      _
    $region67: #{skip_gin_net_forward.1} parent=1 // pred_check_branch
      %128 = sbr.rel (0) target = $region69
    $region68: #{skip_gin_net_forward.1} parent=1 // pred_region
      %129 = dma.done [#allocation11], 2048
    $region69: #{skip_gin_net_forward.1} parent=1 // pred_fallthru
      _
    // Predicated region
    $region70: #{skip_gin_net_forward.1} parent=1 // pred_check
      _
    $region71: #{skip_gin_net_forward.1} parent=1 // pred_check_branch
      %131 = sbr.rel (0) target = $region73
    $region72: #{skip_gin_net_forward.1} parent=1 // pred_region
      %132 = dma.done [#allocation14], 128
    $region73: #{skip_gin_net_forward.1} parent=1 // pred_fallthru
      _
    %133 = sfence
    %v135 = vld [vmem:[#allocation2] sm:$0xf]
    %v136 = vld [vmem:[#allocation2 + $0x4] sm:$0xf]
    %v137 = vunpack.c.l.bf16 %v135
    %v138 = vunpack.c.l.bf16 %v136
    %v139 = vld [vmem:[#allocation6] sm:$0xff]
    %v140 = vld [vmem:[#allocation6 + $0x8] sm:$0xff]
    %s141 = sld [smem:[#allocation8]]
    %v142 = vstv %s141
    %v143 = vmul.f32 %v142, %v137
    %v144 = vmul.f32 %v142, %v138
    %vm145 = vcmask 130048
    %v147 = vsel %vm145, %v139, 0
    %v150 = vsel %vm145, %v140, 0
    %152 = vmatprep.subr.mxu0 0.0
    %153 = vmatpush1.msra.mxu0 %v137
    %154 = vmatprep.subr.mxu0 0.0
    %155 = vmatpush1.msra.mxu0 %v138
    %156 = vmatprep.subr.mxu0 0.0
    %157 = vmatpush1.msra.mxu0 0.0
    %158 = vmatprep.subr.mxu0 0.0
    %159 = vmatpush1.msra.mxu0 0.0
    %160 = vmatprep.subr.mxu0 0.0
    %161 = vmatpush1.msra.mxu0 0.0
    %162 = vmatprep.subr.mxu0 0.0
    %163 = vmatpush1.msra.mxu0 0.0
    %164 = vmatprep.subr.mxu0 0.0
    %165 = vmatpush1.msra.mxu0 0.0
    %166 = vmatprep.subr.mxu0 0.0
    %167 = vmatpush1.msra.mxu0 0.0
    %168 = vmatprep.subr.mxu0 0.0
    %169 = vmatpush1.msra.mxu0 0.0
    %170 = vmatprep.subr.mxu0 0.0
    %171 = vmatpush1.msra.mxu0 0.0
    %172 = vmatprep.subr.mxu0 0.0
    %173 = vmatpush1.msra.mxu0 0.0
    %174 = vmatprep.subr.mxu0 0.0
    %175 = vmatpush1.msra.mxu0 0.0
    %176 = vmatprep.subr.mxu0 0.0
    %177 = vmatpush1.msra.mxu0 0.0
    %178 = vmatprep.subr.mxu0 0.0
    %179 = vmatpush1.msra.mxu0 0.0
    %180 = vmatprep.subr.mxu0 0.0
    %181 = vmatpush1.msra.mxu0 0.0
    %182 = vmatprep.subr.mxu0 0.0
    %183 = vmatpush1.msra.mxu0 0.0
    %184 = vmatprep.subr.mxu0 0.0
    %185 = vmatpush1.msra.mxu0 0.0
    %186 = vmatprep.subr.mxu0 0.0
    %187 = vmatpush1.msra.mxu0 0.0
    %188 = vmatprep.subr.mxu0 0.0
    %189 = vmatpush1.msra.mxu0 0.0
    %190 = vmatprep.subr.mxu0 0.0
    %191 = vmatpush1.msra.mxu0 0.0
    %192 = vmatprep.subr.mxu0 0.0
    %193 = vmatpush1.msra.mxu0 0.0
    %194 = vmatprep.subr.mxu0 0.0
    %195 = vmatpush1.msra.mxu0 0.0
    %196 = vmatprep.subr.mxu0 0.0
    %197 = vmatpush1.msra.mxu0 0.0
    %198 = vmatprep.subr.mxu0 0.0
    %199 = vmatpush1.msra.mxu0 0.0
    %200 = vmatprep.subr.mxu0 0.0
    %201 = vmatpush1.msra.mxu0 0.0
    %202 = vmatprep.subr.mxu0 0.0
    %203 = vmatpush1.msra.mxu0 0.0
    %204 = vmatprep.subr.mxu0 0.0
    %205 = vmatpush1.msra.mxu0 0.0
    %206 = vmatprep.subr.mxu0 0.0
    %207 = vmatpush1.msra.mxu0 0.0
    %208 = vmatprep.subr.mxu0 0.0
    %209 = vmatpush1.msra.mxu0 0.0
    %210 = vmatprep.subr.mxu0 0.0
    %211 = vmatpush1.msra.mxu0 0.0
    %212 = vmatprep.subr.mxu0 0.0
    %213 = vmatpush1.msra.mxu0 0.0
    %214 = vmatprep.subr.mxu0 0.0
    %215 = vmatpush1.msra.mxu0 0.0
    %216 = vmatprep.mubr.f32.mxu0 0.0
    %217 = vmatmul.mubr.f32.gmra.mrb[0].mxu0 %v147
    %v218 = vpop.f32.mrb[0].mxu0
    %v219 = vadd.f32 %v143, %v218
    %v220 = vpop.f32.mrb[0].mxu0
    %221 = vmatprep.mubr.f32.mxu0 0.0
    %222 = vmatmul.mubr.f32.gmra.mrb[0].mxu0 %v150
    %v223 = vpop.f32.mrb[0].mxu0
    %v224 = vadd.f32 %v144, %v223
    %v225 = vpop.f32.mrb[0].mxu0
    %226 = vdwg.mxu0
    %v227 = vpack.c.bf16 %v224, %v219
    %v228 = vld [vmem:[#allocation9] sm:$0xf]
    %v229 = vld [vmem:[#allocation9 + $0x4] sm:$0xf]
    %v230 = vld [vmem:[#allocation9 + $0x8] sm:$0xf]
    %v231 = vld [vmem:[#allocation9 + $0xc] sm:$0xf]
    %v232 = vld [vmem:[#allocation10] sm:$0x1]
    %v234 = vlaneseq
    %v235 = vshrl.u32 %v234, 7
    %v236 = vsub.s32 0, %v235
    %v237 = vrot.slane %v232, %v236
    %v243 = vunpack.c.l.b16 %v228
    %v244 = vunpack.c.l.b16 %v229
    %v245 = vunpack.c.l.b16 %v230
    %v246 = vunpack.c.l.b16 %v231
    %v247 = vpack.c.b16 %v244, %v243
    %v248 = vpack.c.b16 %v246, %v245
    %vm251 = vcmask 261120
    %v253 = vsel %vm251, %v227, 0
    %255 = vmatprep.subr.bf16.mxu0 0
    %256 = vmatpush1.bf16.msra.mxu0 %v247
    %257 = vmatprep.subr.bf16.mxu0 0
    %258 = vmatpush1.bf16.msra.mxu0 %v248
    %259 = vmatprep.subr.bf16.mxu0 0
    %260 = vmatpush1.bf16.msra.mxu0 0
    %261 = vmatprep.subr.bf16.mxu0 0
    %262 = vmatpush1.bf16.msra.mxu0 0
    %263 = vmatprep.subr.bf16.mxu0 0
    %264 = vmatpush1.bf16.msra.mxu0 0
    %265 = vmatprep.subr.bf16.mxu0 0
    %266 = vmatpush1.bf16.msra.mxu0 0
    %267 = vmatprep.subr.bf16.mxu0 0
    %268 = vmatpush1.bf16.msra.mxu0 0
    %269 = vmatprep.subr.bf16.mxu0 0
    %270 = vmatpush1.bf16.msra.mxu0 0
    %271 = vmatprep.subr.bf16.mxu0 0
    %272 = vmatpush1.bf16.msra.mxu0 0
    %273 = vmatprep.subr.bf16.mxu0 0
    %274 = vmatpush1.bf16.msra.mxu0 0
    %275 = vmatprep.subr.bf16.mxu0 0
    %276 = vmatpush1.bf16.msra.mxu0 0
    %277 = vmatprep.subr.bf16.mxu0 0
    %278 = vmatpush1.bf16.msra.mxu0 0
    %279 = vmatprep.subr.bf16.mxu0 0
    %280 = vmatpush1.bf16.msra.mxu0 0
    %281 = vmatprep.subr.bf16.mxu0 0
    %282 = vmatpush1.bf16.msra.mxu0 0
    %283 = vmatprep.subr.bf16.mxu0 0
    %284 = vmatpush1.bf16.msra.mxu0 0
    %285 = vmatprep.subr.bf16.mxu0 0
    %286 = vmatpush1.bf16.msra.mxu0 0
    %287 = vmatprep.mubr.bf16.mxu0 0
    %288 = vmatmul.mubr.bf16.gmra.mrb[0].mxu0 %v253
    %v289 = vpop.f32.mrb[0].mxu0
    %v290 = vadd.f32 %v237, %v289
    %v291 = vpop.f32.mrb[0].mxu0
    %v292 = vpop.f32.mrb[0].mxu0
    %v293 = vadd.f32 %v237, %v292
    %v294 = vpop.f32.mrb[0].mxu0
    %295 = vdwg.mxu0
    %v296 = vmax.f32 %v290, 0.0
    %v297 = vmax.f32 %v293, 0.0
    %v298 = vpack.c.bf16 %v297, %v296
    %v299 = vld [vmem:[#allocation12] sm:$0xf]
    %v300 = vld [vmem:[#allocation12 + $0x4] sm:$0xf]
    %v301 = vld [vmem:[#allocation12 + $0x8] sm:$0xf]
    %v302 = vld [vmem:[#allocation12 + $0xc] sm:$0xf]
    %v303 = vld [vmem:[#allocation13] sm:$0x1]
    %v305 = vlaneseq
    %v306 = vshrl.u32 %v305, 7
    %v307 = vsub.s32 0, %v306
    %v308 = vrot.slane %v303, %v307
    %v314 = vunpack.c.l.b16 %v299
    %v315 = vunpack.c.l.b16 %v300
    %v316 = vunpack.c.l.b16 %v301
    %v317 = vunpack.c.l.b16 %v302
    %v318 = vpack.c.b16 %v315, %v314
    %v319 = vpack.c.b16 %v317, %v316
    %v323 = vsel %vm251, %v298, 0
    %325 = vmatprep.subr.bf16.mxu0 0
    %326 = vmatpush1.bf16.msra.mxu0 %v318
    %327 = vmatprep.subr.bf16.mxu0 0
    %328 = vmatpush1.bf16.msra.mxu0 %v319
    %329 = vmatprep.subr.bf16.mxu0 0
    %330 = vmatpush1.bf16.msra.mxu0 0
    %331 = vmatprep.subr.bf16.mxu0 0
    %332 = vmatpush1.bf16.msra.mxu0 0
    %333 = vmatprep.subr.bf16.mxu0 0
    %334 = vmatpush1.bf16.msra.mxu0 0
    %335 = vmatprep.subr.bf16.mxu0 0
    %336 = vmatpush1.bf16.msra.mxu0 0
    %337 = vmatprep.subr.bf16.mxu0 0
    %338 = vmatpush1.bf16.msra.mxu0 0
    %339 = vmatprep.subr.bf16.mxu0 0
    %340 = vmatpush1.bf16.msra.mxu0 0
    %341 = vmatprep.subr.bf16.mxu0 0
    %342 = vmatpush1.bf16.msra.mxu0 0
    %343 = vmatprep.subr.bf16.mxu0 0
    %344 = vmatpush1.bf16.msra.mxu0 0
    %345 = vmatprep.subr.bf16.mxu0 0
    %346 = vmatpush1.bf16.msra.mxu0 0
    %347 = vmatprep.subr.bf16.mxu0 0
    %348 = vmatpush1.bf16.msra.mxu0 0
    %349 = vmatprep.subr.bf16.mxu0 0
    %350 = vmatpush1.bf16.msra.mxu0 0
    %351 = vmatprep.subr.bf16.mxu0 0
    %352 = vmatpush1.bf16.msra.mxu0 0
    %353 = vmatprep.subr.bf16.mxu0 0
    %354 = vmatpush1.bf16.msra.mxu0 0
    %355 = vmatprep.subr.bf16.mxu0 0
    %356 = vmatpush1.bf16.msra.mxu0 0
    %357 = vmatprep.mubr.bf16.mxu0 0
    %358 = vmatmul.mubr.bf16.gmra.mrb[0].mxu0 %v323
    %v359 = vpop.f32.mrb[0].mxu0
    %v360 = vadd.f32 %v308, %v359
    %v361 = vpop.f32.mrb[0].mxu0
    %v362 = vpop.f32.mrb[0].mxu0
    %v363 = vadd.f32 %v308, %v362
    %v364 = vpop.f32.mrb[0].mxu0
    %365 = vdwg.mxu0
    %v366 = vmax.f32 %v360, 0.0
    %v367 = vmax.f32 %v363, 0.0
    %s368 = sld [smem:[#allocation8 + $0x1]]
    %v369 = vstv %s368
    %v370 = vmul.f32 %v369, %v366
    %v371 = vmul.f32 %v369, %v367
    %372 = vmatprep.subr.mxu0 0.0
    %373 = vmatpush1.msra.mxu0 %v366
    %374 = vmatprep.subr.mxu0 0.0
    %375 = vmatpush1.msra.mxu0 %v367
    %376 = vmatprep.subr.mxu0 0.0
    %377 = vmatpush1.msra.mxu0 0.0
    %378 = vmatprep.subr.mxu0 0.0
    %379 = vmatpush1.msra.mxu0 0.0
    %380 = vmatprep.subr.mxu0 0.0
    %381 = vmatpush1.msra.mxu0 0.0
    %382 = vmatprep.subr.mxu0 0.0
    %383 = vmatpush1.msra.mxu0 0.0
    %384 = vmatprep.subr.mxu0 0.0
    %385 = vmatpush1.msra.mxu0 0.0
    %386 = vmatprep.subr.mxu0 0.0
    %387 = vmatpush1.msra.mxu0 0.0
    %388 = vmatprep.subr.mxu0 0.0
    %389 = vmatpush1.msra.mxu0 0.0
    %390 = vmatprep.subr.mxu0 0.0
    %391 = vmatpush1.msra.mxu0 0.0
    %392 = vmatprep.subr.mxu0 0.0
    %393 = vmatpush1.msra.mxu0 0.0
    %394 = vmatprep.subr.mxu0 0.0
    %395 = vmatpush1.msra.mxu0 0.0
    %396 = vmatprep.subr.mxu0 0.0
    %397 = vmatpush1.msra.mxu0 0.0
    %398 = vmatprep.subr.mxu0 0.0
    %399 = vmatpush1.msra.mxu0 0.0
    %400 = vmatprep.subr.mxu0 0.0
    %401 = vmatpush1.msra.mxu0 0.0
    %402 = vmatprep.subr.mxu0 0.0
    %403 = vmatpush1.msra.mxu0 0.0
    %404 = vmatprep.subr.mxu0 0.0
    %405 = vmatpush1.msra.mxu0 0.0
    %406 = vmatprep.subr.mxu0 0.0
    %407 = vmatpush1.msra.mxu0 0.0
    %408 = vmatprep.subr.mxu0 0.0
    %409 = vmatpush1.msra.mxu0 0.0
    %410 = vmatprep.subr.mxu0 0.0
    %411 = vmatpush1.msra.mxu0 0.0
    %412 = vmatprep.subr.mxu0 0.0
    %413 = vmatpush1.msra.mxu0 0.0
    %414 = vmatprep.subr.mxu0 0.0
    %415 = vmatpush1.msra.mxu0 0.0
    %416 = vmatprep.subr.mxu0 0.0
    %417 = vmatpush1.msra.mxu0 0.0
    %418 = vmatprep.subr.mxu0 0.0
    %419 = vmatpush1.msra.mxu0 0.0
    %420 = vmatprep.subr.mxu0 0.0
    %421 = vmatpush1.msra.mxu0 0.0
    %422 = vmatprep.subr.mxu0 0.0
    %423 = vmatpush1.msra.mxu0 0.0
    %424 = vmatprep.subr.mxu0 0.0
    %425 = vmatpush1.msra.mxu0 0.0
    %426 = vmatprep.subr.mxu0 0.0
    %427 = vmatpush1.msra.mxu0 0.0
    %428 = vmatprep.subr.mxu0 0.0
    %429 = vmatpush1.msra.mxu0 0.0
    %430 = vmatprep.subr.mxu0 0.0
    %431 = vmatpush1.msra.mxu0 0.0
    %432 = vmatprep.subr.mxu0 0.0
    %433 = vmatpush1.msra.mxu0 0.0
    %434 = vmatprep.subr.mxu0 0.0
    %435 = vmatpush1.msra.mxu0 0.0
    %436 = vmatprep.mubr.f32.mxu0 0.0
    %437 = vmatmul.mubr.f32.gmra.mrb[0].mxu0 %v147
    %v438 = vpop.f32.mrb[0].mxu0
    %v439 = vadd.f32 %v370, %v438
    %v440 = vpop.f32.mrb[0].mxu0
    %441 = vmatprep.mubr.f32.mxu0 0.0
    %442 = vmatmul.mubr.f32.gmra.mrb[0].mxu0 %v150
    %v443 = vpop.f32.mrb[0].mxu0
    %v444 = vadd.f32 %v371, %v443
    %v445 = vpop.f32.mrb[0].mxu0
    %446 = vdwg.mxu0
    %v447 = vpack.c.bf16 %v444, %v439
    %s448 = scalar_lea.vmem [#allocation9], 16
    %v449 = vld [vmem:[%s448] sm:$0xf]
    %v450 = vld [vmem:[%s448 + $0x4] sm:$0xf]
    %v451 = vld [vmem:[%s448 + $0x8] sm:$0xf]
    %v452 = vld [vmem:[%s448 + $0xc] sm:$0xf]
    %s453 = scalar_lea.vmem [#allocation10], 1
    %v454 = vld [vmem:[%s453] sm:$0x1]
    %v456 = vlaneseq
    %v457 = vshrl.u32 %v456, 7
    %v458 = vsub.s32 0, %v457
    %v459 = vrot.slane %v454, %v458
    %v465 = vunpack.c.l.b16 %v449
    %v466 = vunpack.c.l.b16 %v450
    %v467 = vunpack.c.l.b16 %v451
    %v468 = vunpack.c.l.b16 %v452
    %v469 = vpack.c.b16 %v466, %v465
    %v470 = vpack.c.b16 %v468, %v467
    %v474 = vsel %vm251, %v447, 0
    %476 = vmatprep.subr.bf16.mxu0 0
    %477 = vmatpush1.bf16.msra.mxu0 %v469
    %478 = vmatprep.subr.bf16.mxu0 0
    %479 = vmatpush1.bf16.msra.mxu0 %v470
    %480 = vmatprep.subr.bf16.mxu0 0
    %481 = vmatpush1.bf16.msra.mxu0 0
    %482 = vmatprep.subr.bf16.mxu0 0
    %483 = vmatpush1.bf16.msra.mxu0 0
    %484 = vmatprep.subr.bf16.mxu0 0
    %485 = vmatpush1.bf16.msra.mxu0 0
    %486 = vmatprep.subr.bf16.mxu0 0
    %487 = vmatpush1.bf16.msra.mxu0 0
    %488 = vmatprep.subr.bf16.mxu0 0
    %489 = vmatpush1.bf16.msra.mxu0 0
    %490 = vmatprep.subr.bf16.mxu0 0
    %491 = vmatpush1.bf16.msra.mxu0 0
    %492 = vmatprep.subr.bf16.mxu0 0
    %493 = vmatpush1.bf16.msra.mxu0 0
    %494 = vmatprep.subr.bf16.mxu0 0
    %495 = vmatpush1.bf16.msra.mxu0 0
    %496 = vmatprep.subr.bf16.mxu0 0
    %497 = vmatpush1.bf16.msra.mxu0 0
    %498 = vmatprep.subr.bf16.mxu0 0
    %499 = vmatpush1.bf16.msra.mxu0 0
    %500 = vmatprep.subr.bf16.mxu0 0
    %501 = vmatpush1.bf16.msra.mxu0 0
    %502 = vmatprep.subr.bf16.mxu0 0
    %503 = vmatpush1.bf16.msra.mxu0 0
    %504 = vmatprep.subr.bf16.mxu0 0
    %505 = vmatpush1.bf16.msra.mxu0 0
    %506 = vmatprep.subr.bf16.mxu0 0
    %507 = vmatpush1.bf16.msra.mxu0 0
    %508 = vmatprep.mubr.bf16.mxu0 0
    %509 = vmatmul.mubr.bf16.gmra.mrb[0].mxu0 %v474
    %v510 = vpop.f32.mrb[0].mxu0
    %v511 = vadd.f32 %v459, %v510
    %v512 = vpop.f32.mrb[0].mxu0
    %v513 = vpop.f32.mrb[0].mxu0
    %v514 = vadd.f32 %v459, %v513
    %v515 = vpop.f32.mrb[0].mxu0
    %516 = vdwg.mxu0
    %v517 = vmax.f32 %v511, 0.0
    %v518 = vmax.f32 %v514, 0.0
    %v519 = vpack.c.bf16 %v518, %v517
    %s520 = scalar_lea.vmem [#allocation12], 16
    %v521 = vld [vmem:[%s520] sm:$0xf]
    %v522 = vld [vmem:[%s520 + $0x4] sm:$0xf]
    %v523 = vld [vmem:[%s520 + $0x8] sm:$0xf]
    %v524 = vld [vmem:[%s520 + $0xc] sm:$0xf]
    %s525 = scalar_lea.vmem [#allocation13], 1
    %v526 = vld [vmem:[%s525] sm:$0x1]
    %v528 = vlaneseq
    %v529 = vshrl.u32 %v528, 7
    %v530 = vsub.s32 0, %v529
    %v531 = vrot.slane %v526, %v530
    %v537 = vunpack.c.l.b16 %v521
    %v538 = vunpack.c.l.b16 %v522
    %v539 = vunpack.c.l.b16 %v523
    %v540 = vunpack.c.l.b16 %v524
    %v541 = vpack.c.b16 %v538, %v537
    %v542 = vpack.c.b16 %v540, %v539
    %v546 = vsel %vm251, %v519, 0
    %548 = vmatprep.subr.bf16.mxu0 0
    %549 = vmatpush1.bf16.msra.mxu0 %v541
    %550 = vmatprep.subr.bf16.mxu0 0
    %551 = vmatpush1.bf16.msra.mxu0 %v542
    %552 = vmatprep.subr.bf16.mxu0 0
    %553 = vmatpush1.bf16.msra.mxu0 0
    %554 = vmatprep.subr.bf16.mxu0 0
    %555 = vmatpush1.bf16.msra.mxu0 0
    %556 = vmatprep.subr.bf16.mxu0 0
    %557 = vmatpush1.bf16.msra.mxu0 0
    %558 = vmatprep.subr.bf16.mxu0 0
    %559 = vmatpush1.bf16.msra.mxu0 0
    %560 = vmatprep.subr.bf16.mxu0 0
    %561 = vmatpush1.bf16.msra.mxu0 0
    %562 = vmatprep.subr.bf16.mxu0 0
    %563 = vmatpush1.bf16.msra.mxu0 0
    %564 = vmatprep.subr.bf16.mxu0 0
    %565 = vmatpush1.bf16.msra.mxu0 0
    %566 = vmatprep.subr.bf16.mxu0 0
    %567 = vmatpush1.bf16.msra.mxu0 0
    %568 = vmatprep.subr.bf16.mxu0 0
    %569 = vmatpush1.bf16.msra.mxu0 0
    %570 = vmatprep.subr.bf16.mxu0 0
    %571 = vmatpush1.bf16.msra.mxu0 0
    %572 = vmatprep.subr.bf16.mxu0 0
    %573 = vmatpush1.bf16.msra.mxu0 0
    %574 = vmatprep.subr.bf16.mxu0 0
    %575 = vmatpush1.bf16.msra.mxu0 0
    %576 = vmatprep.subr.bf16.mxu0 0
    %577 = vmatpush1.bf16.msra.mxu0 0
    %578 = vmatprep.subr.bf16.mxu0 0
    %579 = vmatpush1.bf16.msra.mxu0 0
    %580 = vmatprep.mubr.bf16.mxu0 0
    %581 = vmatmul.mubr.bf16.gmra.mrb[0].mxu0 %v546
    %v582 = vpop.f32.mrb[0].mxu0
    %v583 = vadd.f32 %v531, %v582
    %v584 = vpop.f32.mrb[0].mxu0
    %v585 = vpop.f32.mrb[0].mxu0
    %v586 = vadd.f32 %v531, %v585
    %v587 = vpop.f32.mrb[0].mxu0
    %588 = vdwg.mxu0
    %v589 = vmax.f32 %v583, 0.0
    %v590 = vmax.f32 %v586, 0.0
    %v591 = vadd.f32 %v589, 0.0
    %v592 = vadd.f32 %v590, 0.0
    %s593 = sld [smem:[#allocation8 + $0x2]]
    %v594 = vstv %s593
    %v595 = vmul.f32 %v594, %v589
    %v596 = vmul.f32 %v594, %v590
    %597 = vmatprep.subr.mxu0 0.0
    %598 = vmatpush1.msra.mxu0 %v589
    %599 = vmatprep.subr.mxu0 0.0
    %600 = vmatpush1.msra.mxu0 %v590
    %601 = vmatprep.subr.mxu0 0.0
    %602 = vmatpush1.msra.mxu0 0.0
    %603 = vmatprep.subr.mxu0 0.0
    %604 = vmatpush1.msra.mxu0 0.0
    %605 = vmatprep.subr.mxu0 0.0
    %606 = vmatpush1.msra.mxu0 0.0
    %607 = vmatprep.subr.mxu0 0.0
    %608 = vmatpush1.msra.mxu0 0.0
    %609 = vmatprep.subr.mxu0 0.0
    %610 = vmatpush1.msra.mxu0 0.0
    %611 = vmatprep.subr.mxu0 0.0
    %612 = vmatpush1.msra.mxu0 0.0
    %613 = vmatprep.subr.mxu0 0.0
    %614 = vmatpush1.msra.mxu0 0.0
    %615 = vmatprep.subr.mxu0 0.0
    %616 = vmatpush1.msra.mxu0 0.0
    %617 = vmatprep.subr.mxu0 0.0
    %618 = vmatpush1.msra.mxu0 0.0
    %619 = vmatprep.subr.mxu0 0.0
    %620 = vmatpush1.msra.mxu0 0.0
    %621 = vmatprep.subr.mxu0 0.0
    %622 = vmatpush1.msra.mxu0 0.0
    %623 = vmatprep.subr.mxu0 0.0
    %624 = vmatpush1.msra.mxu0 0.0
    %625 = vmatprep.subr.mxu0 0.0
    %626 = vmatpush1.msra.mxu0 0.0
    %627 = vmatprep.subr.mxu0 0.0
    %628 = vmatpush1.msra.mxu0 0.0
    %629 = vmatprep.subr.mxu0 0.0
    %630 = vmatpush1.msra.mxu0 0.0
    %631 = vmatprep.subr.mxu0 0.0
    %632 = vmatpush1.msra.mxu0 0.0
    %633 = vmatprep.subr.mxu0 0.0
    %634 = vmatpush1.msra.mxu0 0.0
    %635 = vmatprep.subr.mxu0 0.0
    %636 = vmatpush1.msra.mxu0 0.0
    %637 = vmatprep.subr.mxu0 0.0
    %638 = vmatpush1.msra.mxu0 0.0
    %639 = vmatprep.subr.mxu0 0.0
    %640 = vmatpush1.msra.mxu0 0.0
    %641 = vmatprep.subr.mxu0 0.0
    %642 = vmatpush1.msra.mxu0 0.0
    %643 = vmatprep.subr.mxu0 0.0
    %644 = vmatpush1.msra.mxu0 0.0
    %645 = vmatprep.subr.mxu0 0.0
    %646 = vmatpush1.msra.mxu0 0.0
    %647 = vmatprep.subr.mxu0 0.0
    %648 = vmatpush1.msra.mxu0 0.0
    %649 = vmatprep.subr.mxu0 0.0
    %650 = vmatpush1.msra.mxu0 0.0
    %651 = vmatprep.subr.mxu0 0.0
    %652 = vmatpush1.msra.mxu0 0.0
    %653 = vmatprep.subr.mxu0 0.0
    %654 = vmatpush1.msra.mxu0 0.0
    %655 = vmatprep.subr.mxu0 0.0
    %656 = vmatpush1.msra.mxu0 0.0
    %657 = vmatprep.subr.mxu0 0.0
    %658 = vmatpush1.msra.mxu0 0.0
    %659 = vmatprep.subr.mxu0 0.0
    %660 = vmatpush1.msra.mxu0 0.0
    %661 = vmatprep.mubr.f32.mxu0 0.0
    %662 = vmatmul.mubr.f32.gmra.mrb[0].mxu0 %v147
    %v663 = vpop.f32.mrb[0].mxu0
    %v664 = vadd.f32 %v595, %v663
    %v665 = vpop.f32.mrb[0].mxu0
    %666 = vmatprep.mubr.f32.mxu0 0.0
    %667 = vmatmul.mubr.f32.gmra.mrb[0].mxu0 %v150
    %v668 = vpop.f32.mrb[0].mxu0
    %v669 = vadd.f32 %v596, %v668
    %v670 = vpop.f32.mrb[0].mxu0
    %671 = vdwg.mxu0
    %v672 = vpack.c.bf16 %v669, %v664
    %s673 = scalar_lea.vmem [#allocation9], 32
    %v674 = vld [vmem:[%s673] sm:$0xf]
    %v675 = vld [vmem:[%s673 + $0x4] sm:$0xf]
    %v676 = vld [vmem:[%s673 + $0x8] sm:$0xf]
    %v677 = vld [vmem:[%s673 + $0xc] sm:$0xf]
    %s678 = scalar_lea.vmem [#allocation10], 2
    %v679 = vld [vmem:[%s678] sm:$0x1]
    %v681 = vlaneseq
    %v682 = vshrl.u32 %v681, 7
    %v683 = vsub.s32 0, %v682
    %v684 = vrot.slane %v679, %v683
    %v690 = vunpack.c.l.b16 %v674
    %v691 = vunpack.c.l.b16 %v675
    %v692 = vunpack.c.l.b16 %v676
    %v693 = vunpack.c.l.b16 %v677
    %v694 = vpack.c.b16 %v691, %v690
    %v695 = vpack.c.b16 %v693, %v692
    %v699 = vsel %vm251, %v672, 0
    %701 = vmatprep.subr.bf16.mxu0 0
    %702 = vmatpush1.bf16.msra.mxu0 %v694
    %703 = vmatprep.subr.bf16.mxu0 0
    %704 = vmatpush1.bf16.msra.mxu0 %v695
    %705 = vmatprep.subr.bf16.mxu0 0
    %706 = vmatpush1.bf16.msra.mxu0 0
    %707 = vmatprep.subr.bf16.mxu0 0
    %708 = vmatpush1.bf16.msra.mxu0 0
    %709 = vmatprep.subr.bf16.mxu0 0
    %710 = vmatpush1.bf16.msra.mxu0 0
    %711 = vmatprep.subr.bf16.mxu0 0
    %712 = vmatpush1.bf16.msra.mxu0 0
    %713 = vmatprep.subr.bf16.mxu0 0
    %714 = vmatpush1.bf16.msra.mxu0 0
    %715 = vmatprep.subr.bf16.mxu0 0
    %716 = vmatpush1.bf16.msra.mxu0 0
    %717 = vmatprep.subr.bf16.mxu0 0
    %718 = vmatpush1.bf16.msra.mxu0 0
    %719 = vmatprep.subr.bf16.mxu0 0
    %720 = vmatpush1.bf16.msra.mxu0 0
    %721 = vmatprep.subr.bf16.mxu0 0
    %722 = vmatpush1.bf16.msra.mxu0 0
    %723 = vmatprep.subr.bf16.mxu0 0
    %724 = vmatpush1.bf16.msra.mxu0 0
    %725 = vmatprep.subr.bf16.mxu0 0
    %726 = vmatpush1.bf16.msra.mxu0 0
    %727 = vmatprep.subr.bf16.mxu0 0
    %728 = vmatpush1.bf16.msra.mxu0 0
    %729 = vmatprep.subr.bf16.mxu0 0
    %730 = vmatpush1.bf16.msra.mxu0 0
    %731 = vmatprep.subr.bf16.mxu0 0
    %732 = vmatpush1.bf16.msra.mxu0 0
    %733 = vmatprep.mubr.bf16.mxu0 0
    %734 = vmatmul.mubr.bf16.gmra.mrb[0].mxu0 %v699
    %v735 = vpop.f32.mrb[0].mxu0
    %v736 = vadd.f32 %v684, %v735
    %v737 = vpop.f32.mrb[0].mxu0
    %v738 = vpop.f32.mrb[0].mxu0
    %v739 = vadd.f32 %v684, %v738
    %v740 = vpop.f32.mrb[0].mxu0
    %741 = vdwg.mxu0
    %v742 = vmax.f32 %v736, 0.0
    %v743 = vmax.f32 %v739, 0.0
    %v744 = vpack.c.bf16 %v743, %v742
    %s745 = scalar_lea.vmem [#allocation12], 32
    %v746 = vld [vmem:[%s745] sm:$0xf]
    %v747 = vld [vmem:[%s745 + $0x4] sm:$0xf]
    %v748 = vld [vmem:[%s745 + $0x8] sm:$0xf]
    %v749 = vld [vmem:[%s745 + $0xc] sm:$0xf]
    %s750 = scalar_lea.vmem [#allocation13], 2
    %v751 = vld [vmem:[%s750] sm:$0x1]
    %v753 = vlaneseq
    %v754 = vshrl.u32 %v753, 7
    %v755 = vsub.s32 0, %v754
    %v756 = vrot.slane %v751, %v755
    %v762 = vunpack.c.l.b16 %v746
    %v763 = vunpack.c.l.b16 %v747
    %v764 = vunpack.c.l.b16 %v748
    %v765 = vunpack.c.l.b16 %v749
    %v766 = vpack.c.b16 %v763, %v762
    %v767 = vpack.c.b16 %v765, %v764
    %v771 = vsel %vm251, %v744, 0
    %773 = vmatprep.subr.bf16.mxu0 0
    %774 = vmatpush1.bf16.msra.mxu0 %v766
    %775 = vmatprep.subr.bf16.mxu0 0
    %776 = vmatpush1.bf16.msra.mxu0 %v767
    %777 = vmatprep.subr.bf16.mxu0 0
    %778 = vmatpush1.bf16.msra.mxu0 0
    %779 = vmatprep.subr.bf16.mxu0 0
    %780 = vmatpush1.bf16.msra.mxu0 0
    %781 = vmatprep.subr.bf16.mxu0 0
    %782 = vmatpush1.bf16.msra.mxu0 0
    %783 = vmatprep.subr.bf16.mxu0 0
    %784 = vmatpush1.bf16.msra.mxu0 0
    %785 = vmatprep.subr.bf16.mxu0 0
    %786 = vmatpush1.bf16.msra.mxu0 0
    %787 = vmatprep.subr.bf16.mxu0 0
    %788 = vmatpush1.bf16.msra.mxu0 0
    %789 = vmatprep.subr.bf16.mxu0 0
    %790 = vmatpush1.bf16.msra.mxu0 0
    %791 = vmatprep.subr.bf16.mxu0 0
    %792 = vmatpush1.bf16.msra.mxu0 0
    %793 = vmatprep.subr.bf16.mxu0 0
    %794 = vmatpush1.bf16.msra.mxu0 0
    %795 = vmatprep.subr.bf16.mxu0 0
    %796 = vmatpush1.bf16.msra.mxu0 0
    %797 = vmatprep.subr.bf16.mxu0 0
    %798 = vmatpush1.bf16.msra.mxu0 0
    %799 = vmatprep.subr.bf16.mxu0 0
    %800 = vmatpush1.bf16.msra.mxu0 0
    %801 = vmatprep.subr.bf16.mxu0 0
    %802 = vmatpush1.bf16.msra.mxu0 0
    %803 = vmatprep.subr.bf16.mxu0 0
    %804 = vmatpush1.bf16.msra.mxu0 0
    %805 = vmatprep.mubr.bf16.mxu0 0
    %806 = vmatmul.mubr.bf16.gmra.mrb[0].mxu0 %v771
    %v807 = vpop.f32.mrb[0].mxu0
    %v808 = vadd.f32 %v756, %v807
    %v809 = vpop.f32.mrb[0].mxu0
    %v810 = vpop.f32.mrb[0].mxu0
    %v811 = vadd.f32 %v756, %v810
    %v812 = vpop.f32.mrb[0].mxu0
    %813 = vdwg.mxu0
    %v814 = vmax.f32 %v808, 0.0
    %v815 = vmax.f32 %v811, 0.0
    %s816 = sld [smem:[#allocation8 + $0x3]]
    %v817 = vstv %s816
    %v818 = vmul.f32 %v817, %v814
    %v819 = vmul.f32 %v817, %v815
    %820 = vmatprep.subr.mxu0 0.0
    %821 = vmatpush1.msra.mxu0 %v814
    %822 = vmatprep.subr.mxu0 0.0
    %823 = vmatpush1.msra.mxu0 %v815
    %824 = vmatprep.subr.mxu0 0.0
    %825 = vmatpush1.msra.mxu0 0.0
    %826 = vmatprep.subr.mxu0 0.0
    %827 = vmatpush1.msra.mxu0 0.0
    %828 = vmatprep.subr.mxu0 0.0
    %829 = vmatpush1.msra.mxu0 0.0
    %830 = vmatprep.subr.mxu0 0.0
    %831 = vmatpush1.msra.mxu0 0.0
    %832 = vmatprep.subr.mxu0 0.0
    %833 = vmatpush1.msra.mxu0 0.0
    %834 = vmatprep.subr.mxu0 0.0
    %835 = vmatpush1.msra.mxu0 0.0
    %836 = vmatprep.subr.mxu0 0.0
    %837 = vmatpush1.msra.mxu0 0.0
    %838 = vmatprep.subr.mxu0 0.0
    %839 = vmatpush1.msra.mxu0 0.0
    %840 = vmatprep.subr.mxu0 0.0
    %841 = vmatpush1.msra.mxu0 0.0
    %842 = vmatprep.subr.mxu0 0.0
    %843 = vmatpush1.msra.mxu0 0.0
    %844 = vmatprep.subr.mxu0 0.0
    %845 = vmatpush1.msra.mxu0 0.0
    %846 = vmatprep.subr.mxu0 0.0
    %847 = vmatpush1.msra.mxu0 0.0
    %848 = vmatprep.subr.mxu0 0.0
    %849 = vmatpush1.msra.mxu0 0.0
    %850 = vmatprep.subr.mxu0 0.0
    %851 = vmatpush1.msra.mxu0 0.0
    %852 = vmatprep.subr.mxu0 0.0
    %853 = vmatpush1.msra.mxu0 0.0
    %854 = vmatprep.subr.mxu0 0.0
    %855 = vmatpush1.msra.mxu0 0.0
    %856 = vmatprep.subr.mxu0 0.0
    %857 = vmatpush1.msra.mxu0 0.0
    %858 = vmatprep.subr.mxu0 0.0
    %859 = vmatpush1.msra.mxu0 0.0
    %860 = vmatprep.subr.mxu0 0.0
    %861 = vmatpush1.msra.mxu0 0.0
    %862 = vmatprep.subr.mxu0 0.0
    %863 = vmatpush1.msra.mxu0 0.0
    %864 = vmatprep.subr.mxu0 0.0
    %865 = vmatpush1.msra.mxu0 0.0
    %866 = vmatprep.subr.mxu0 0.0
    %867 = vmatpush1.msra.mxu0 0.0
    %868 = vmatprep.subr.mxu0 0.0
    %869 = vmatpush1.msra.mxu0 0.0
    %870 = vmatprep.subr.mxu0 0.0
    %871 = vmatpush1.msra.mxu0 0.0
    %872 = vmatprep.subr.mxu0 0.0
    %873 = vmatpush1.msra.mxu0 0.0
    %874 = vmatprep.subr.mxu0 0.0
    %875 = vmatpush1.msra.mxu0 0.0
    %876 = vmatprep.subr.mxu0 0.0
    %877 = vmatpush1.msra.mxu0 0.0
    %878 = vmatprep.subr.mxu0 0.0
    %879 = vmatpush1.msra.mxu0 0.0
    %880 = vmatprep.subr.mxu0 0.0
    %881 = vmatpush1.msra.mxu0 0.0
    %882 = vmatprep.subr.mxu0 0.0
    %883 = vmatpush1.msra.mxu0 0.0
    %884 = vmatprep.mubr.f32.mxu0 0.0
    %885 = vmatmul.mubr.f32.gmra.mrb[0].mxu0 %v147
    %v886 = vpop.f32.mrb[0].mxu0
    %v887 = vadd.f32 %v818, %v886
    %v888 = vpop.f32.mrb[0].mxu0
    %889 = vmatprep.mubr.f32.mxu0 0.0
    %890 = vmatmul.mubr.f32.gmra.mrb[0].mxu0 %v150
    %v891 = vpop.f32.mrb[0].mxu0
    %v892 = vadd.f32 %v819, %v891
    %v893 = vpop.f32.mrb[0].mxu0
    %894 = vdwg.mxu0
    %v895 = vpack.c.bf16 %v892, %v887
    %s896 = scalar_lea.vmem [#allocation9], 48
    %v897 = vld [vmem:[%s896] sm:$0xf]
    %v898 = vld [vmem:[%s896 + $0x4] sm:$0xf]
    %v899 = vld [vmem:[%s896 + $0x8] sm:$0xf]
    %v900 = vld [vmem:[%s896 + $0xc] sm:$0xf]
    %s901 = scalar_lea.vmem [#allocation10], 3
    %v902 = vld [vmem:[%s901] sm:$0x1]
    %v904 = vlaneseq
    %v905 = vshrl.u32 %v904, 7
    %v906 = vsub.s32 0, %v905
    %v907 = vrot.slane %v902, %v906
    %v913 = vunpack.c.l.b16 %v897
    %v914 = vunpack.c.l.b16 %v898
    %v915 = vunpack.c.l.b16 %v899
    %v916 = vunpack.c.l.b16 %v900
    %v917 = vpack.c.b16 %v914, %v913
    %v918 = vpack.c.b16 %v916, %v915
    %v922 = vsel %vm251, %v895, 0
    %924 = vmatprep.subr.bf16.mxu0 0
    %925 = vmatpush1.bf16.msra.mxu0 %v917
    %926 = vmatprep.subr.bf16.mxu0 0
    %927 = vmatpush1.bf16.msra.mxu0 %v918
    %928 = vmatprep.subr.bf16.mxu0 0
    %929 = vmatpush1.bf16.msra.mxu0 0
    %930 = vmatprep.subr.bf16.mxu0 0
    %931 = vmatpush1.bf16.msra.mxu0 0
    %932 = vmatprep.subr.bf16.mxu0 0
    %933 = vmatpush1.bf16.msra.mxu0 0
    %934 = vmatprep.subr.bf16.mxu0 0
    %935 = vmatpush1.bf16.msra.mxu0 0
    %936 = vmatprep.subr.bf16.mxu0 0
    %937 = vmatpush1.bf16.msra.mxu0 0
    %938 = vmatprep.subr.bf16.mxu0 0
    %939 = vmatpush1.bf16.msra.mxu0 0
    %940 = vmatprep.subr.bf16.mxu0 0
    %941 = vmatpush1.bf16.msra.mxu0 0
    %942 = vmatprep.subr.bf16.mxu0 0
    %943 = vmatpush1.bf16.msra.mxu0 0
    %944 = vmatprep.subr.bf16.mxu0 0
    %945 = vmatpush1.bf16.msra.mxu0 0
    %946 = vmatprep.subr.bf16.mxu0 0
    %947 = vmatpush1.bf16.msra.mxu0 0
    %948 = vmatprep.subr.bf16.mxu0 0
    %949 = vmatpush1.bf16.msra.mxu0 0
    %950 = vmatprep.subr.bf16.mxu0 0
    %951 = vmatpush1.bf16.msra.mxu0 0
    %952 = vmatprep.subr.bf16.mxu0 0
    %953 = vmatpush1.bf16.msra.mxu0 0
    %954 = vmatprep.subr.bf16.mxu0 0
    %955 = vmatpush1.bf16.msra.mxu0 0
    %956 = vmatprep.mubr.bf16.mxu0 0
    %957 = vmatmul.mubr.bf16.gmra.mrb[0].mxu0 %v922
    %v958 = vpop.f32.mrb[0].mxu0
    %v959 = vadd.f32 %v907, %v958
    %v960 = vpop.f32.mrb[0].mxu0
    %v961 = vpop.f32.mrb[0].mxu0
    %v962 = vadd.f32 %v907, %v961
    %v963 = vpop.f32.mrb[0].mxu0
    %964 = vdwg.mxu0
    %v965 = vmax.f32 %v959, 0.0
    %v966 = vmax.f32 %v962, 0.0
    %v967 = vpack.c.bf16 %v966, %v965
    %s968 = scalar_lea.vmem [#allocation12], 48
    %v969 = vld [vmem:[%s968] sm:$0xf]
    %v970 = vld [vmem:[%s968 + $0x4] sm:$0xf]
    %v971 = vld [vmem:[%s968 + $0x8] sm:$0xf]
    %v972 = vld [vmem:[%s968 + $0xc] sm:$0xf]
    %s973 = scalar_lea.vmem [#allocation13], 3
    %v974 = vld [vmem:[%s973] sm:$0x1]
    %v976 = vlaneseq
    %v977 = vshrl.u32 %v976, 7
    %v978 = vsub.s32 0, %v977
    %v979 = vrot.slane %v974, %v978
    %v985 = vunpack.c.l.b16 %v969
    %v986 = vunpack.c.l.b16 %v970
    %v987 = vunpack.c.l.b16 %v971
    %v988 = vunpack.c.l.b16 %v972
    %v989 = vpack.c.b16 %v986, %v985
    %v990 = vpack.c.b16 %v988, %v987
    %v994 = vsel %vm251, %v967, 0
    %996 = vmatprep.subr.bf16.mxu0 0
    %997 = vmatpush1.bf16.msra.mxu0 %v989
    %998 = vmatprep.subr.bf16.mxu0 0
    %999 = vmatpush1.bf16.msra.mxu0 %v990
    %1000 = vmatprep.subr.bf16.mxu0 0
    %1001 = vmatpush1.bf16.msra.mxu0 0
    %1002 = vmatprep.subr.bf16.mxu0 0
    %1003 = vmatpush1.bf16.msra.mxu0 0
    %1004 = vmatprep.subr.bf16.mxu0 0
    %1005 = vmatpush1.bf16.msra.mxu0 0
    %1006 = vmatprep.subr.bf16.mxu0 0
    %1007 = vmatpush1.bf16.msra.mxu0 0
    %1008 = vmatprep.subr.bf16.mxu0 0
    %1009 = vmatpush1.bf16.msra.mxu0 0
    %1010 = vmatprep.subr.bf16.mxu0 0
    %1011 = vmatpush1.bf16.msra.mxu0 0
    %1012 = vmatprep.subr.bf16.mxu0 0
    %1013 = vmatpush1.bf16.msra.mxu0 0
    %1014 = vmatprep.subr.bf16.mxu0 0
    %1015 = vmatpush1.bf16.msra.mxu0 0
    %1016 = vmatprep.subr.bf16.mxu0 0
    %1017 = vmatpush1.bf16.msra.mxu0 0
    %1018 = vmatprep.subr.bf16.mxu0 0
    %1019 = vmatpush1.bf16.msra.mxu0 0
    %1020 = vmatprep.subr.bf16.mxu0 0
    %1021 = vmatpush1.bf16.msra.mxu0 0
    %1022 = vmatprep.subr.bf16.mxu0 0
    %1023 = vmatpush1.bf16.msra.mxu0 0
    %1024 = vmatprep.subr.bf16.mxu0 0
    %1025 = vmatpush1.bf16.msra.mxu0 0
    %1026 = vmatprep.subr.bf16.mxu0 0
    %1027 = vmatpush1.bf16.msra.mxu0 0
    %1028 = vmatprep.mubr.bf16.mxu0 0
    %1029 = vmatmul.mubr.bf16.gmra.mrb[0].mxu0 %v994
    %v1030 = vpop.f32.mrb[0].mxu0
    %v1031 = vadd.f32 %v979, %v1030
    %v1032 = vpop.f32.mrb[0].mxu0
    %v1033 = vpop.f32.mrb[0].mxu0
    %v1034 = vadd.f32 %v979, %v1033
    %v1035 = vpop.f32.mrb[0].mxu0
    %1036 = vdwg.mxu0
    %v1037 = vmax.f32 %v1031, 0.0
    %v1038 = vmax.f32 %v1034, 0.0
    %v1039 = vadd.f32 %v591, %v1037
    %v1040 = vadd.f32 %v592, %v1038
    %s1041 = sld [smem:[#allocation8 + $0x4]]
    %v1042 = vstv %s1041
    %v1043 = vmul.f32 %v1042, %v1037
    %v1044 = vmul.f32 %v1042, %v1038
    %1045 = vmatprep.subr.mxu0 0.0
    %1046 = vmatpush1.msra.mxu0 %v1037
    %1047 = vmatprep.subr.mxu0 0.0
    %1048 = vmatpush1.msra.mxu0 %v1038
    %1049 = vmatprep.subr.mxu0 0.0
    %1050 = vmatpush1.msra.mxu0 0.0
    %1051 = vmatprep.subr.mxu0 0.0
    %1052 = vmatpush1.msra.mxu0 0.0
    %1053 = vmatprep.subr.mxu0 0.0
    %1054 = vmatpush1.msra.mxu0 0.0
    %1055 = vmatprep.subr.mxu0 0.0
    %1056 = vmatpush1.msra.mxu0 0.0
    %1057 = vmatprep.subr.mxu0 0.0
    %1058 = vmatpush1.msra.mxu0 0.0
    %1059 = vmatprep.subr.mxu0 0.0
    %1060 = vmatpush1.msra.mxu0 0.0
    %1061 = vmatprep.subr.mxu0 0.0
    %1062 = vmatpush1.msra.mxu0 0.0
    %1063 = vmatprep.subr.mxu0 0.0
    %1064 = vmatpush1.msra.mxu0 0.0
    %1065 = vmatprep.subr.mxu0 0.0
    %1066 = vmatpush1.msra.mxu0 0.0
    %1067 = vmatprep.subr.mxu0 0.0
    %1068 = vmatpush1.msra.mxu0 0.0
    %1069 = vmatprep.subr.mxu0 0.0
    %1070 = vmatpush1.msra.mxu0 0.0
    %1071 = vmatprep.subr.mxu0 0.0
    %1072 = vmatpush1.msra.mxu0 0.0
    %1073 = vmatprep.subr.mxu0 0.0
    %1074 = vmatpush1.msra.mxu0 0.0
    %1075 = vmatprep.subr.mxu0 0.0
    %1076 = vmatpush1.msra.mxu0 0.0
    %1077 = vmatprep.subr.mxu0 0.0
    %1078 = vmatpush1.msra.mxu0 0.0
    %1079 = vmatprep.subr.mxu0 0.0
    %1080 = vmatpush1.msra.mxu0 0.0
    %1081 = vmatprep.subr.mxu0 0.0
    %1082 = vmatpush1.msra.mxu0 0.0
    %1083 = vmatprep.subr.mxu0 0.0
    %1084 = vmatpush1.msra.mxu0 0.0
    %1085 = vmatprep.subr.mxu0 0.0
    %1086 = vmatpush1.msra.mxu0 0.0
    %1087 = vmatprep.subr.mxu0 0.0
    %1088 = vmatpush1.msra.mxu0 0.0
    %1089 = vmatprep.subr.mxu0 0.0
    %1090 = vmatpush1.msra.mxu0 0.0
    %1091 = vmatprep.subr.mxu0 0.0
    %1092 = vmatpush1.msra.mxu0 0.0
    %1093 = vmatprep.subr.mxu0 0.0
    %1094 = vmatpush1.msra.mxu0 0.0
    %1095 = vmatprep.subr.mxu0 0.0
    %1096 = vmatpush1.msra.mxu0 0.0
    %1097 = vmatprep.subr.mxu0 0.0
    %1098 = vmatpush1.msra.mxu0 0.0
    %1099 = vmatprep.subr.mxu0 0.0
    %1100 = vmatpush1.msra.mxu0 0.0
    %1101 = vmatprep.subr.mxu0 0.0
    %1102 = vmatpush1.msra.mxu0 0.0
    %1103 = vmatprep.subr.mxu0 0.0
    %1104 = vmatpush1.msra.mxu0 0.0
    %1105 = vmatprep.subr.mxu0 0.0
    %1106 = vmatpush1.msra.mxu0 0.0
    %1107 = vmatprep.subr.mxu0 0.0
    %1108 = vmatpush1.msra.mxu0 0.0
    %1109 = vmatprep.mubr.f32.mxu0 0.0
    %1110 = vmatmul.mubr.f32.gmra.mrb[0].mxu0 %v147
    %v1111 = vpop.f32.mrb[0].mxu0
    %v1112 = vadd.f32 %v1043, %v1111
    %v1113 = vpop.f32.mrb[0].mxu0
    %1114 = vmatprep.mubr.f32.mxu0 0.0
    %1115 = vmatmul.mubr.f32.gmra.mrb[0].mxu0 %v150
    %v1116 = vpop.f32.mrb[0].mxu0
    %v1117 = vadd.f32 %v1044, %v1116
    %v1118 = vpop.f32.mrb[0].mxu0
    %1119 = vdwg.mxu0
    %v1120 = vpack.c.bf16 %v1117, %v1112
    %s1121 = scalar_lea.vmem [#allocation9], 64
    %v1122 = vld [vmem:[%s1121] sm:$0xf]
    %v1123 = vld [vmem:[%s1121 + $0x4] sm:$0xf]
    %v1124 = vld [vmem:[%s1121 + $0x8] sm:$0xf]
    %v1125 = vld [vmem:[%s1121 + $0xc] sm:$0xf]
    %s1126 = scalar_lea.vmem [#allocation10], 4
    %v1127 = vld [vmem:[%s1126] sm:$0x1]
    %v1129 = vlaneseq
    %v1130 = vshrl.u32 %v1129, 7
    %v1131 = vsub.s32 0, %v1130
    %v1132 = vrot.slane %v1127, %v1131
    %v1138 = vunpack.c.l.b16 %v1122
    %v1139 = vunpack.c.l.b16 %v1123
    %v1140 = vunpack.c.l.b16 %v1124
    %v1141 = vunpack.c.l.b16 %v1125
    %v1142 = vpack.c.b16 %v1139, %v1138
    %v1143 = vpack.c.b16 %v1141, %v1140
    %v1147 = vsel %vm251, %v1120, 0
    %1149 = vmatprep.subr.bf16.mxu0 0
    %1150 = vmatpush1.bf16.msra.mxu0 %v1142
    %1151 = vmatprep.subr.bf16.mxu0 0
    %1152 = vmatpush1.bf16.msra.mxu0 %v1143
    %1153 = vmatprep.subr.bf16.mxu0 0
    %1154 = vmatpush1.bf16.msra.mxu0 0
    %1155 = vmatprep.subr.bf16.mxu0 0
    %1156 = vmatpush1.bf16.msra.mxu0 0
    %1157 = vmatprep.subr.bf16.mxu0 0
    %1158 = vmatpush1.bf16.msra.mxu0 0
    %1159 = vmatprep.subr.bf16.mxu0 0
    %1160 = vmatpush1.bf16.msra.mxu0 0
    %1161 = vmatprep.subr.bf16.mxu0 0
    %1162 = vmatpush1.bf16.msra.mxu0 0
    %1163 = vmatprep.subr.bf16.mxu0 0
    %1164 = vmatpush1.bf16.msra.mxu0 0
    %1165 = vmatprep.subr.bf16.mxu0 0
    %1166 = vmatpush1.bf16.msra.mxu0 0
    %1167 = vmatprep.subr.bf16.mxu0 0
    %1168 = vmatpush1.bf16.msra.mxu0 0
    %1169 = vmatprep.subr.bf16.mxu0 0
    %1170 = vmatpush1.bf16.msra.mxu0 0
    %1171 = vmatprep.subr.bf16.mxu0 0
    %1172 = vmatpush1.bf16.msra.mxu0 0
    %1173 = vmatprep.subr.bf16.mxu0 0
    %1174 = vmatpush1.bf16.msra.mxu0 0
    %1175 = vmatprep.subr.bf16.mxu0 0
    %1176 = vmatpush1.bf16.msra.mxu0 0
    %1177 = vmatprep.subr.bf16.mxu0 0
    %1178 = vmatpush1.bf16.msra.mxu0 0
    %1179 = vmatprep.subr.bf16.mxu0 0
    %1180 = vmatpush1.bf16.msra.mxu0 0
    %1181 = vmatprep.mubr.bf16.mxu0 0
    %1182 = vmatmul.mubr.bf16.gmra.mrb[0].mxu0 %v1147
    %v1183 = vpop.f32.mrb[0].mxu0
    %v1184 = vadd.f32 %v1132, %v1183
    %v1185 = vpop.f32.mrb[0].mxu0
    %v1186 = vpop.f32.mrb[0].mxu0
    %v1187 = vadd.f32 %v1132, %v1186
    %v1188 = vpop.f32.mrb[0].mxu0
    %1189 = vdwg.mxu0
    %v1190 = vmax.f32 %v1184, 0.0
    %v1191 = vmax.f32 %v1187, 0.0
    %v1192 = vpack.c.bf16 %v1191, %v1190
    %s1193 = scalar_lea.vmem [#allocation12], 64
    %v1194 = vld [vmem:[%s1193] sm:$0xf]
    %v1195 = vld [vmem:[%s1193 + $0x4] sm:$0xf]
    %v1196 = vld [vmem:[%s1193 + $0x8] sm:$0xf]
    %v1197 = vld [vmem:[%s1193 + $0xc] sm:$0xf]
    %s1198 = scalar_lea.vmem [#allocation13], 4
    %v1199 = vld [vmem:[%s1198] sm:$0x1]
    %v1201 = vlaneseq
    %v1202 = vshrl.u32 %v1201, 7
    %v1203 = vsub.s32 0, %v1202
    %v1204 = vrot.slane %v1199, %v1203
    %v1210 = vunpack.c.l.b16 %v1194
    %v1211 = vunpack.c.l.b16 %v1195
    %v1212 = vunpack.c.l.b16 %v1196
    %v1213 = vunpack.c.l.b16 %v1197
    %v1214 = vpack.c.b16 %v1211, %v1210
    %v1215 = vpack.c.b16 %v1213, %v1212
    %v1219 = vsel %vm251, %v1192, 0
    %1221 = vmatprep.subr.bf16.mxu0 0
    %1222 = vmatpush1.bf16.msra.mxu0 %v1214
    %1223 = vmatprep.subr.bf16.mxu0 0
    %1224 = vmatpush1.bf16.msra.mxu0 %v1215
    %1225 = vmatprep.subr.bf16.mxu0 0
    %1226 = vmatpush1.bf16.msra.mxu0 0
    %1227 = vmatprep.subr.bf16.mxu0 0
    %1228 = vmatpush1.bf16.msra.mxu0 0
    %1229 = vmatprep.subr.bf16.mxu0 0
    %1230 = vmatpush1.bf16.msra.mxu0 0
    %1231 = vmatprep.subr.bf16.mxu0 0
    %1232 = vmatpush1.bf16.msra.mxu0 0
    %1233 = vmatprep.subr.bf16.mxu0 0
    %1234 = vmatpush1.bf16.msra.mxu0 0
    %1235 = vmatprep.subr.bf16.mxu0 0
    %1236 = vmatpush1.bf16.msra.mxu0 0
    %1237 = vmatprep.subr.bf16.mxu0 0
    %1238 = vmatpush1.bf16.msra.mxu0 0
    %1239 = vmatprep.subr.bf16.mxu0 0
    %1240 = vmatpush1.bf16.msra.mxu0 0
    %1241 = vmatprep.subr.bf16.mxu0 0
    %1242 = vmatpush1.bf16.msra.mxu0 0
    %1243 = vmatprep.subr.bf16.mxu0 0
    %1244 = vmatpush1.bf16.msra.mxu0 0
    %1245 = vmatprep.subr.bf16.mxu0 0
    %1246 = vmatpush1.bf16.msra.mxu0 0
    %1247 = vmatprep.subr.bf16.mxu0 0
    %1248 = vmatpush1.bf16.msra.mxu0 0
    %1249 = vmatprep.subr.bf16.mxu0 0
    %1250 = vmatpush1.bf16.msra.mxu0 0
    %1251 = vmatprep.subr.bf16.mxu0 0
    %1252 = vmatpush1.bf16.msra.mxu0 0
    %1253 = vmatprep.mubr.bf16.mxu0 0
    %1254 = vmatmul.mubr.bf16.gmra.mrb[0].mxu0 %v1219
    %v1255 = vpop.f32.mrb[0].mxu0
    %v1256 = vadd.f32 %v1204, %v1255
    %v1257 = vpop.f32.mrb[0].mxu0
    %v1258 = vpop.f32.mrb[0].mxu0
    %v1259 = vadd.f32 %v1204, %v1258
    %v1260 = vpop.f32.mrb[0].mxu0
    %1261 = vdwg.mxu0
    %v1262 = vmax.f32 %v1256, 0.0
    %v1263 = vmax.f32 %v1259, 0.0
    %s1264 = sld [smem:[#allocation8 + $0x5]]
    %v1265 = vstv %s1264
    %v1266 = vmul.f32 %v1265, %v1262
    %v1267 = vmul.f32 %v1265, %v1263
    %1268 = vmatprep.subr.mxu0 0.0
    %1269 = vmatpush1.msra.mxu0 %v1262
    %1270 = vmatprep.subr.mxu0 0.0
    %1271 = vmatpush1.msra.mxu0 %v1263
    %1272 = vmatprep.subr.mxu0 0.0
    %1273 = vmatpush1.msra.mxu0 0.0
    %1274 = vmatprep.subr.mxu0 0.0
    %1275 = vmatpush1.msra.mxu0 0.0
    %1276 = vmatprep.subr.mxu0 0.0
    %1277 = vmatpush1.msra.mxu0 0.0
    %1278 = vmatprep.subr.mxu0 0.0
    %1279 = vmatpush1.msra.mxu0 0.0
    %1280 = vmatprep.subr.mxu0 0.0
    %1281 = vmatpush1.msra.mxu0 0.0
    %1282 = vmatprep.subr.mxu0 0.0
    %1283 = vmatpush1.msra.mxu0 0.0
    %1284 = vmatprep.subr.mxu0 0.0
    %1285 = vmatpush1.msra.mxu0 0.0
    %1286 = vmatprep.subr.mxu0 0.0
    %1287 = vmatpush1.msra.mxu0 0.0
    %1288 = vmatprep.subr.mxu0 0.0
    %1289 = vmatpush1.msra.mxu0 0.0
    %1290 = vmatprep.subr.mxu0 0.0
    %1291 = vmatpush1.msra.mxu0 0.0
    %1292 = vmatprep.subr.mxu0 0.0
    %1293 = vmatpush1.msra.mxu0 0.0
    %1294 = vmatprep.subr.mxu0 0.0
    %1295 = vmatpush1.msra.mxu0 0.0
    %1296 = vmatprep.subr.mxu0 0.0
    %1297 = vmatpush1.msra.mxu0 0.0
    %1298 = vmatprep.subr.mxu0 0.0
    %1299 = vmatpush1.msra.mxu0 0.0
    %1300 = vmatprep.subr.mxu0 0.0
    %1301 = vmatpush1.msra.mxu0 0.0
    %1302 = vmatprep.subr.mxu0 0.0
    %1303 = vmatpush1.msra.mxu0 0.0
    %1304 = vmatprep.subr.mxu0 0.0
    %1305 = vmatpush1.msra.mxu0 0.0
    %1306 = vmatprep.subr.mxu0 0.0
    %1307 = vmatpush1.msra.mxu0 0.0
    %1308 = vmatprep.subr.mxu0 0.0
    %1309 = vmatpush1.msra.mxu0 0.0
    %1310 = vmatprep.subr.mxu0 0.0
    %1311 = vmatpush1.msra.mxu0 0.0
    %1312 = vmatprep.subr.mxu0 0.0
    %1313 = vmatpush1.msra.mxu0 0.0
    %1314 = vmatprep.subr.mxu0 0.0
    %1315 = vmatpush1.msra.mxu0 0.0
    %1316 = vmatprep.subr.mxu0 0.0
    %1317 = vmatpush1.msra.mxu0 0.0
    %1318 = vmatprep.subr.mxu0 0.0
    %1319 = vmatpush1.msra.mxu0 0.0
    %1320 = vmatprep.subr.mxu0 0.0
    %1321 = vmatpush1.msra.mxu0 0.0
    %1322 = vmatprep.subr.mxu0 0.0
    %1323 = vmatpush1.msra.mxu0 0.0
    %1324 = vmatprep.subr.mxu0 0.0
    %1325 = vmatpush1.msra.mxu0 0.0
    %1326 = vmatprep.subr.mxu0 0.0
    %1327 = vmatpush1.msra.mxu0 0.0
    %1328 = vmatprep.subr.mxu0 0.0
    %1329 = vmatpush1.msra.mxu0 0.0
    %1330 = vmatprep.subr.mxu0 0.0
    %1331 = vmatpush1.msra.mxu0 0.0
    %1332 = vmatprep.mubr.f32.mxu0 0.0
    %1333 = vmatmul.mubr.f32.gmra.mrb[0].mxu0 %v147
    %v1334 = vpop.f32.mrb[0].mxu0
    %v1335 = vadd.f32 %v1266, %v1334
    %v1336 = vpop.f32.mrb[0].mxu0
    %1337 = vmatprep.mubr.f32.mxu0 0.0
    %1338 = vmatmul.mubr.f32.gmra.mrb[0].mxu0 %v150
    %v1339 = vpop.f32.mrb[0].mxu0
    %v1340 = vadd.f32 %v1267, %v1339
    %v1341 = vpop.f32.mrb[0].mxu0
    %1342 = vdwg.mxu0
    %v1343 = vpack.c.bf16 %v1340, %v1335
    %s1344 = scalar_lea.vmem [#allocation9], 80
    %v1345 = vld [vmem:[%s1344] sm:$0xf]
    %v1346 = vld [vmem:[%s1344 + $0x4] sm:$0xf]
    %v1347 = vld [vmem:[%s1344 + $0x8] sm:$0xf]
    %v1348 = vld [vmem:[%s1344 + $0xc] sm:$0xf]
    %s1349 = scalar_lea.vmem [#allocation10], 5
    %v1350 = vld [vmem:[%s1349] sm:$0x1]
    %v1352 = vlaneseq
    %v1353 = vshrl.u32 %v1352, 7
    %v1354 = vsub.s32 0, %v1353
    %v1355 = vrot.slane %v1350, %v1354
    %v1361 = vunpack.c.l.b16 %v1345
    %v1362 = vunpack.c.l.b16 %v1346
    %v1363 = vunpack.c.l.b16 %v1347
    %v1364 = vunpack.c.l.b16 %v1348
    %v1365 = vpack.c.b16 %v1362, %v1361
    %v1366 = vpack.c.b16 %v1364, %v1363
    %v1370 = vsel %vm251, %v1343, 0
    %1372 = vmatprep.subr.bf16.mxu0 0
    %1373 = vmatpush1.bf16.msra.mxu0 %v1365
    %1374 = vmatprep.subr.bf16.mxu0 0
    %1375 = vmatpush1.bf16.msra.mxu0 %v1366
    %1376 = vmatprep.subr.bf16.mxu0 0
    %1377 = vmatpush1.bf16.msra.mxu0 0
    %1378 = vmatprep.subr.bf16.mxu0 0
    %1379 = vmatpush1.bf16.msra.mxu0 0
    %1380 = vmatprep.subr.bf16.mxu0 0
    %1381 = vmatpush1.bf16.msra.mxu0 0
    %1382 = vmatprep.subr.bf16.mxu0 0
    %1383 = vmatpush1.bf16.msra.mxu0 0
    %1384 = vmatprep.subr.bf16.mxu0 0
    %1385 = vmatpush1.bf16.msra.mxu0 0
    %1386 = vmatprep.subr.bf16.mxu0 0
    %1387 = vmatpush1.bf16.msra.mxu0 0
    %1388 = vmatprep.subr.bf16.mxu0 0
    %1389 = vmatpush1.bf16.msra.mxu0 0
    %1390 = vmatprep.subr.bf16.mxu0 0
    %1391 = vmatpush1.bf16.msra.mxu0 0
    %1392 = vmatprep.subr.bf16.mxu0 0
    %1393 = vmatpush1.bf16.msra.mxu0 0
    %1394 = vmatprep.subr.bf16.mxu0 0
    %1395 = vmatpush1.bf16.msra.mxu0 0
    %1396 = vmatprep.subr.bf16.mxu0 0
    %1397 = vmatpush1.bf16.msra.mxu0 0
    %1398 = vmatprep.subr.bf16.mxu0 0
    %1399 = vmatpush1.bf16.msra.mxu0 0
    %1400 = vmatprep.subr.bf16.mxu0 0
    %1401 = vmatpush1.bf16.msra.mxu0 0
    %1402 = vmatprep.subr.bf16.mxu0 0
    %1403 = vmatpush1.bf16.msra.mxu0 0
    %1404 = vmatprep.mubr.bf16.mxu0 0
    %1405 = vmatmul.mubr.bf16.gmra.mrb[0].mxu0 %v1370
    %v1406 = vpop.f32.mrb[0].mxu0
    %v1407 = vadd.f32 %v1355, %v1406
    %v1408 = vpop.f32.mrb[0].mxu0
    %v1409 = vpop.f32.mrb[0].mxu0
    %v1410 = vadd.f32 %v1355, %v1409
    %v1411 = vpop.f32.mrb[0].mxu0
    %1412 = vdwg.mxu0
    %v1413 = vmax.f32 %v1407, 0.0
    %v1414 = vmax.f32 %v1410, 0.0
    %v1415 = vpack.c.bf16 %v1414, %v1413
    %s1416 = scalar_lea.vmem [#allocation12], 80
    %v1417 = vld [vmem:[%s1416] sm:$0xf]
    %v1418 = vld [vmem:[%s1416 + $0x4] sm:$0xf]
    %v1419 = vld [vmem:[%s1416 + $0x8] sm:$0xf]
    %v1420 = vld [vmem:[%s1416 + $0xc] sm:$0xf]
    %s1421 = scalar_lea.vmem [#allocation13], 5
    %v1422 = vld [vmem:[%s1421] sm:$0x1]
    %v1424 = vlaneseq
    %v1425 = vshrl.u32 %v1424, 7
    %v1426 = vsub.s32 0, %v1425
    %v1427 = vrot.slane %v1422, %v1426
    %v1433 = vunpack.c.l.b16 %v1417
    %v1434 = vunpack.c.l.b16 %v1418
    %v1435 = vunpack.c.l.b16 %v1419
    %v1436 = vunpack.c.l.b16 %v1420
    %v1437 = vpack.c.b16 %v1434, %v1433
    %v1438 = vpack.c.b16 %v1436, %v1435
    %v1442 = vsel %vm251, %v1415, 0
    %1444 = vmatprep.subr.bf16.mxu0 0
    %1445 = vmatpush1.bf16.msra.mxu0 %v1437
    %1446 = vmatprep.subr.bf16.mxu0 0
    %1447 = vmatpush1.bf16.msra.mxu0 %v1438
    %1448 = vmatprep.subr.bf16.mxu0 0
    %1449 = vmatpush1.bf16.msra.mxu0 0
    %1450 = vmatprep.subr.bf16.mxu0 0
    %1451 = vmatpush1.bf16.msra.mxu0 0
    %1452 = vmatprep.subr.bf16.mxu0 0
    %1453 = vmatpush1.bf16.msra.mxu0 0
    %1454 = vmatprep.subr.bf16.mxu0 0
    %1455 = vmatpush1.bf16.msra.mxu0 0
    %1456 = vmatprep.subr.bf16.mxu0 0
    %1457 = vmatpush1.bf16.msra.mxu0 0
    %1458 = vmatprep.subr.bf16.mxu0 0
    %1459 = vmatpush1.bf16.msra.mxu0 0
    %1460 = vmatprep.subr.bf16.mxu0 0
    %1461 = vmatpush1.bf16.msra.mxu0 0
    %1462 = vmatprep.subr.bf16.mxu0 0
    %1463 = vmatpush1.bf16.msra.mxu0 0
    %1464 = vmatprep.subr.bf16.mxu0 0
    %1465 = vmatpush1.bf16.msra.mxu0 0
    %1466 = vmatprep.subr.bf16.mxu0 0
    %1467 = vmatpush1.bf16.msra.mxu0 0
    %1468 = vmatprep.subr.bf16.mxu0 0
    %1469 = vmatpush1.bf16.msra.mxu0 0
    %1470 = vmatprep.subr.bf16.mxu0 0
    %1471 = vmatpush1.bf16.msra.mxu0 0
    %1472 = vmatprep.subr.bf16.mxu0 0
    %1473 = vmatpush1.bf16.msra.mxu0 0
    %1474 = vmatprep.subr.bf16.mxu0 0
    %1475 = vmatpush1.bf16.msra.mxu0 0
    %1476 = vmatprep.mubr.bf16.mxu0 0
    %1477 = vmatmul.mubr.bf16.gmra.mrb[0].mxu0 %v1442
    %v1478 = vpop.f32.mrb[0].mxu0
    %v1479 = vadd.f32 %v1427, %v1478
    %v1480 = vpop.f32.mrb[0].mxu0
    %v1481 = vpop.f32.mrb[0].mxu0
    %v1482 = vadd.f32 %v1427, %v1481
    %v1483 = vpop.f32.mrb[0].mxu0
    %1484 = vdwg.mxu0
    %v1485 = vmax.f32 %v1479, 0.0
    %v1486 = vmax.f32 %v1482, 0.0
    %v1487 = vadd.f32 %v1039, %v1485
    %v1488 = vadd.f32 %v1040, %v1486
    %s1489 = sld [smem:[#allocation8 + $0x6]]
    %v1490 = vstv %s1489
    %v1491 = vmul.f32 %v1490, %v1485
    %v1492 = vmul.f32 %v1490, %v1486
    %1493 = vmatprep.subr.mxu0 0.0
    %1494 = vmatpush1.msra.mxu0 %v1485
    %1495 = vmatprep.subr.mxu0 0.0
    %1496 = vmatpush1.msra.mxu0 %v1486
    %1497 = vmatprep.subr.mxu0 0.0
    %1498 = vmatpush1.msra.mxu0 0.0
    %1499 = vmatprep.subr.mxu0 0.0
    %1500 = vmatpush1.msra.mxu0 0.0
    %1501 = vmatprep.subr.mxu0 0.0
    %1502 = vmatpush1.msra.mxu0 0.0
    %1503 = vmatprep.subr.mxu0 0.0
    %1504 = vmatpush1.msra.mxu0 0.0
    %1505 = vmatprep.subr.mxu0 0.0
    %1506 = vmatpush1.msra.mxu0 0.0
    %1507 = vmatprep.subr.mxu0 0.0
    %1508 = vmatpush1.msra.mxu0 0.0
    %1509 = vmatprep.subr.mxu0 0.0
    %1510 = vmatpush1.msra.mxu0 0.0
    %1511 = vmatprep.subr.mxu0 0.0
    %1512 = vmatpush1.msra.mxu0 0.0
    %1513 = vmatprep.subr.mxu0 0.0
    %1514 = vmatpush1.msra.mxu0 0.0
    %1515 = vmatprep.subr.mxu0 0.0
    %1516 = vmatpush1.msra.mxu0 0.0
    %1517 = vmatprep.subr.mxu0 0.0
    %1518 = vmatpush1.msra.mxu0 0.0
    %1519 = vmatprep.subr.mxu0 0.0
    %1520 = vmatpush1.msra.mxu0 0.0
    %1521 = vmatprep.subr.mxu0 0.0
    %1522 = vmatpush1.msra.mxu0 0.0
    %1523 = vmatprep.subr.mxu0 0.0
    %1524 = vmatpush1.msra.mxu0 0.0
    %1525 = vmatprep.subr.mxu0 0.0
    %1526 = vmatpush1.msra.mxu0 0.0
    %1527 = vmatprep.subr.mxu0 0.0
    %1528 = vmatpush1.msra.mxu0 0.0
    %1529 = vmatprep.subr.mxu0 0.0
    %1530 = vmatpush1.msra.mxu0 0.0
    %1531 = vmatprep.subr.mxu0 0.0
    %1532 = vmatpush1.msra.mxu0 0.0
    %1533 = vmatprep.subr.mxu0 0.0
    %1534 = vmatpush1.msra.mxu0 0.0
    %1535 = vmatprep.subr.mxu0 0.0
    %1536 = vmatpush1.msra.mxu0 0.0
    %1537 = vmatprep.subr.mxu0 0.0
    %1538 = vmatpush1.msra.mxu0 0.0
    %1539 = vmatprep.subr.mxu0 0.0
    %1540 = vmatpush1.msra.mxu0 0.0
    %1541 = vmatprep.subr.mxu0 0.0
    %1542 = vmatpush1.msra.mxu0 0.0
    %1543 = vmatprep.subr.mxu0 0.0
    %1544 = vmatpush1.msra.mxu0 0.0
    %1545 = vmatprep.subr.mxu0 0.0
    %1546 = vmatpush1.msra.mxu0 0.0
    %1547 = vmatprep.subr.mxu0 0.0
    %1548 = vmatpush1.msra.mxu0 0.0
    %1549 = vmatprep.subr.mxu0 0.0
    %1550 = vmatpush1.msra.mxu0 0.0
    %1551 = vmatprep.subr.mxu0 0.0
    %1552 = vmatpush1.msra.mxu0 0.0
    %1553 = vmatprep.subr.mxu0 0.0
    %1554 = vmatpush1.msra.mxu0 0.0
    %1555 = vmatprep.subr.mxu0 0.0
    %1556 = vmatpush1.msra.mxu0 0.0
    %1557 = vmatprep.mubr.f32.mxu0 0.0
    %1558 = vmatmul.mubr.f32.gmra.mrb[0].mxu0 %v147
    %v1559 = vpop.f32.mrb[0].mxu0
    %v1560 = vadd.f32 %v1491, %v1559
    %v1561 = vpop.f32.mrb[0].mxu0
    %1562 = vmatprep.mubr.f32.mxu0 0.0
    %1563 = vmatmul.mubr.f32.gmra.mrb[0].mxu0 %v150
    %v1564 = vpop.f32.mrb[0].mxu0
    %v1565 = vadd.f32 %v1492, %v1564
    %v1566 = vpop.f32.mrb[0].mxu0
    %1567 = vdwg.mxu0
    %v1568 = vpack.c.bf16 %v1565, %v1560
    %s1569 = scalar_lea.vmem [#allocation9], 96
    %v1570 = vld [vmem:[%s1569] sm:$0xf]
    %v1571 = vld [vmem:[%s1569 + $0x4] sm:$0xf]
    %v1572 = vld [vmem:[%s1569 + $0x8] sm:$0xf]
    %v1573 = vld [vmem:[%s1569 + $0xc] sm:$0xf]
    %s1574 = scalar_lea.vmem [#allocation10], 6
    %v1575 = vld [vmem:[%s1574] sm:$0x1]
    %v1577 = vlaneseq
    %v1578 = vshrl.u32 %v1577, 7
    %v1579 = vsub.s32 0, %v1578
    %v1580 = vrot.slane %v1575, %v1579
    %v1586 = vunpack.c.l.b16 %v1570
    %v1587 = vunpack.c.l.b16 %v1571
    %v1588 = vunpack.c.l.b16 %v1572
    %v1589 = vunpack.c.l.b16 %v1573
    %v1590 = vpack.c.b16 %v1587, %v1586
    %v1591 = vpack.c.b16 %v1589, %v1588
    %v1595 = vsel %vm251, %v1568, 0
    %1597 = vmatprep.subr.bf16.mxu0 0
    %1598 = vmatpush1.bf16.msra.mxu0 %v1590
    %1599 = vmatprep.subr.bf16.mxu0 0
    %1600 = vmatpush1.bf16.msra.mxu0 %v1591
    %1601 = vmatprep.subr.bf16.mxu0 0
    %1602 = vmatpush1.bf16.msra.mxu0 0
    %1603 = vmatprep.subr.bf16.mxu0 0
    %1604 = vmatpush1.bf16.msra.mxu0 0
    %1605 = vmatprep.subr.bf16.mxu0 0
    %1606 = vmatpush1.bf16.msra.mxu0 0
    %1607 = vmatprep.subr.bf16.mxu0 0
    %1608 = vmatpush1.bf16.msra.mxu0 0
    %1609 = vmatprep.subr.bf16.mxu0 0
    %1610 = vmatpush1.bf16.msra.mxu0 0
    %1611 = vmatprep.subr.bf16.mxu0 0
    %1612 = vmatpush1.bf16.msra.mxu0 0
    %1613 = vmatprep.subr.bf16.mxu0 0
    %1614 = vmatpush1.bf16.msra.mxu0 0
    %1615 = vmatprep.subr.bf16.mxu0 0
    %1616 = vmatpush1.bf16.msra.mxu0 0
    %1617 = vmatprep.subr.bf16.mxu0 0
    %1618 = vmatpush1.bf16.msra.mxu0 0
    %1619 = vmatprep.subr.bf16.mxu0 0
    %1620 = vmatpush1.bf16.msra.mxu0 0
    %1621 = vmatprep.subr.bf16.mxu0 0
    %1622 = vmatpush1.bf16.msra.mxu0 0
    %1623 = vmatprep.subr.bf16.mxu0 0
    %1624 = vmatpush1.bf16.msra.mxu0 0
    %1625 = vmatprep.subr.bf16.mxu0 0
    %1626 = vmatpush1.bf16.msra.mxu0 0
    %1627 = vmatprep.subr.bf16.mxu0 0
    %1628 = vmatpush1.bf16.msra.mxu0 0
    %1629 = vmatprep.mubr.bf16.mxu0 0
    %1630 = vmatmul.mubr.bf16.gmra.mrb[0].mxu0 %v1595
    %v1631 = vpop.f32.mrb[0].mxu0
    %v1632 = vadd.f32 %v1580, %v1631
    %v1633 = vpop.f32.mrb[0].mxu0
    %v1634 = vpop.f32.mrb[0].mxu0
    %v1635 = vadd.f32 %v1580, %v1634
    %v1636 = vpop.f32.mrb[0].mxu0
    %1637 = vdwg.mxu0
    %v1638 = vmax.f32 %v1632, 0.0
    %v1639 = vmax.f32 %v1635, 0.0
    %v1640 = vpack.c.bf16 %v1639, %v1638
    %s1641 = scalar_lea.vmem [#allocation12], 96
    %v1642 = vld [vmem:[%s1641] sm:$0xf]
    %v1643 = vld [vmem:[%s1641 + $0x4] sm:$0xf]
    %v1644 = vld [vmem:[%s1641 + $0x8] sm:$0xf]
    %v1645 = vld [vmem:[%s1641 + $0xc] sm:$0xf]
    %s1646 = scalar_lea.vmem [#allocation13], 6
    %v1647 = vld [vmem:[%s1646] sm:$0x1]
    %v1649 = vlaneseq
    %v1650 = vshrl.u32 %v1649, 7
    %v1651 = vsub.s32 0, %v1650
    %v1652 = vrot.slane %v1647, %v1651
    %v1658 = vunpack.c.l.b16 %v1642
    %v1659 = vunpack.c.l.b16 %v1643
    %v1660 = vunpack.c.l.b16 %v1644
    %v1661 = vunpack.c.l.b16 %v1645
    %v1662 = vpack.c.b16 %v1659, %v1658
    %v1663 = vpack.c.b16 %v1661, %v1660
    %v1667 = vsel %vm251, %v1640, 0
    %1669 = vmatprep.subr.bf16.mxu0 0
    %1670 = vmatpush1.bf16.msra.mxu0 %v1662
    %1671 = vmatprep.subr.bf16.mxu0 0
    %1672 = vmatpush1.bf16.msra.mxu0 %v1663
    %1673 = vmatprep.subr.bf16.mxu0 0
    %1674 = vmatpush1.bf16.msra.mxu0 0
    %1675 = vmatprep.subr.bf16.mxu0 0
    %1676 = vmatpush1.bf16.msra.mxu0 0
    %1677 = vmatprep.subr.bf16.mxu0 0
    %1678 = vmatpush1.bf16.msra.mxu0 0
    %1679 = vmatprep.subr.bf16.mxu0 0
    %1680 = vmatpush1.bf16.msra.mxu0 0
    %1681 = vmatprep.subr.bf16.mxu0 0
    %1682 = vmatpush1.bf16.msra.mxu0 0
    %1683 = vmatprep.subr.bf16.mxu0 0
    %1684 = vmatpush1.bf16.msra.mxu0 0
    %1685 = vmatprep.subr.bf16.mxu0 0
    %1686 = vmatpush1.bf16.msra.mxu0 0
    %1687 = vmatprep.subr.bf16.mxu0 0
    %1688 = vmatpush1.bf16.msra.mxu0 0
    %1689 = vmatprep.subr.bf16.mxu0 0
    %1690 = vmatpush1.bf16.msra.mxu0 0
    %1691 = vmatprep.subr.bf16.mxu0 0
    %1692 = vmatpush1.bf16.msra.mxu0 0
    %1693 = vmatprep.subr.bf16.mxu0 0
    %1694 = vmatpush1.bf16.msra.mxu0 0
    %1695 = vmatprep.subr.bf16.mxu0 0
    %1696 = vmatpush1.bf16.msra.mxu0 0
    %1697 = vmatprep.subr.bf16.mxu0 0
    %1698 = vmatpush1.bf16.msra.mxu0 0
    %1699 = vmatprep.subr.bf16.mxu0 0
    %1700 = vmatpush1.bf16.msra.mxu0 0
    %1701 = vmatprep.mubr.bf16.mxu0 0
    %1702 = vmatmul.mubr.bf16.gmra.mrb[0].mxu0 %v1667
    %v1703 = vpop.f32.mrb[0].mxu0
    %v1704 = vadd.f32 %v1652, %v1703
    %v1705 = vpop.f32.mrb[0].mxu0
    %v1706 = vpop.f32.mrb[0].mxu0
    %v1707 = vadd.f32 %v1652, %v1706
    %v1708 = vpop.f32.mrb[0].mxu0
    %1709 = vdwg.mxu0
    %v1710 = vmax.f32 %v1704, 0.0
    %v1711 = vmax.f32 %v1707, 0.0
    %s1712 = sld [smem:[#allocation8 + $0x7]]
    %v1713 = vstv %s1712
    %v1714 = vmul.f32 %v1713, %v1710
    %v1715 = vmul.f32 %v1713, %v1711
    %1716 = vmatprep.subr.mxu0 0.0
    %1717 = vmatpush1.msra.mxu0 %v1710
    %1718 = vmatprep.subr.mxu0 0.0
    %1719 = vmatpush1.msra.mxu0 %v1711
    %1720 = vmatprep.subr.mxu0 0.0
    %1721 = vmatpush1.msra.mxu0 0.0
    %1722 = vmatprep.subr.mxu0 0.0
    %1723 = vmatpush1.msra.mxu0 0.0
    %1724 = vmatprep.subr.mxu0 0.0
    %1725 = vmatpush1.msra.mxu0 0.0
    %1726 = vmatprep.subr.mxu0 0.0
    %1727 = vmatpush1.msra.mxu0 0.0
    %1728 = vmatprep.subr.mxu0 0.0
    %1729 = vmatpush1.msra.mxu0 0.0
    %1730 = vmatprep.subr.mxu0 0.0
    %1731 = vmatpush1.msra.mxu0 0.0
    %1732 = vmatprep.subr.mxu0 0.0
    %1733 = vmatpush1.msra.mxu0 0.0
    %1734 = vmatprep.subr.mxu0 0.0
    %1735 = vmatpush1.msra.mxu0 0.0
    %1736 = vmatprep.subr.mxu0 0.0
    %1737 = vmatpush1.msra.mxu0 0.0
    %1738 = vmatprep.subr.mxu0 0.0
    %1739 = vmatpush1.msra.mxu0 0.0
    %1740 = vmatprep.subr.mxu0 0.0
    %1741 = vmatpush1.msra.mxu0 0.0
    %1742 = vmatprep.subr.mxu0 0.0
    %1743 = vmatpush1.msra.mxu0 0.0
    %1744 = vmatprep.subr.mxu0 0.0
    %1745 = vmatpush1.msra.mxu0 0.0
    %1746 = vmatprep.subr.mxu0 0.0
    %1747 = vmatpush1.msra.mxu0 0.0
    %1748 = vmatprep.subr.mxu0 0.0
    %1749 = vmatpush1.msra.mxu0 0.0
    %1750 = vmatprep.subr.mxu0 0.0
    %1751 = vmatpush1.msra.mxu0 0.0
    %1752 = vmatprep.subr.mxu0 0.0
    %1753 = vmatpush1.msra.mxu0 0.0
    %1754 = vmatprep.subr.mxu0 0.0
    %1755 = vmatpush1.msra.mxu0 0.0
    %1756 = vmatprep.subr.mxu0 0.0
    %1757 = vmatpush1.msra.mxu0 0.0
    %1758 = vmatprep.subr.mxu0 0.0
    %1759 = vmatpush1.msra.mxu0 0.0
    %1760 = vmatprep.subr.mxu0 0.0
    %1761 = vmatpush1.msra.mxu0 0.0
    %1762 = vmatprep.subr.mxu0 0.0
    %1763 = vmatpush1.msra.mxu0 0.0
    %1764 = vmatprep.subr.mxu0 0.0
    %1765 = vmatpush1.msra.mxu0 0.0
    %1766 = vmatprep.subr.mxu0 0.0
    %1767 = vmatpush1.msra.mxu0 0.0
    %1768 = vmatprep.subr.mxu0 0.0
    %1769 = vmatpush1.msra.mxu0 0.0
    %1770 = vmatprep.subr.mxu0 0.0
    %1771 = vmatpush1.msra.mxu0 0.0
    %1772 = vmatprep.subr.mxu0 0.0
    %1773 = vmatpush1.msra.mxu0 0.0
    %1774 = vmatprep.subr.mxu0 0.0
    %1775 = vmatpush1.msra.mxu0 0.0
    %1776 = vmatprep.subr.mxu0 0.0
    %1777 = vmatpush1.msra.mxu0 0.0
    %1778 = vmatprep.subr.mxu0 0.0
    %1779 = vmatpush1.msra.mxu0 0.0
    %1780 = vmatprep.mubr.f32.mxu0 0.0
    %1781 = vmatmul.mubr.f32.gmra.mrb[0].mxu0 %v147
    %v1782 = vpop.f32.mrb[0].mxu0
    %v1783 = vadd.f32 %v1714, %v1782
    %v1784 = vpop.f32.mrb[0].mxu0
    %1785 = vmatprep.mubr.f32.mxu0 0.0
    %1786 = vmatmul.mubr.f32.gmra.mrb[0].mxu0 %v150
    %v1787 = vpop.f32.mrb[0].mxu0
    %v1788 = vadd.f32 %v1715, %v1787
    %v1789 = vpop.f32.mrb[0].mxu0
    %1790 = vdwg.mxu0
    %v1791 = vpack.c.bf16 %v1788, %v1783
    %s1792 = scalar_lea.vmem [#allocation9], 112
    %v1793 = vld [vmem:[%s1792] sm:$0xf]
    %v1794 = vld [vmem:[%s1792 + $0x4] sm:$0xf]
    %v1795 = vld [vmem:[%s1792 + $0x8] sm:$0xf]
    %v1796 = vld [vmem:[%s1792 + $0xc] sm:$0xf]
    %s1797 = scalar_lea.vmem [#allocation10], 7
    %v1798 = vld [vmem:[%s1797] sm:$0x1]
    %v1800 = vlaneseq
    %v1801 = vshrl.u32 %v1800, 7
    %v1802 = vsub.s32 0, %v1801
    %v1803 = vrot.slane %v1798, %v1802
    %v1809 = vunpack.c.l.b16 %v1793
    %v1810 = vunpack.c.l.b16 %v1794
    %v1811 = vunpack.c.l.b16 %v1795
    %v1812 = vunpack.c.l.b16 %v1796
    %v1813 = vpack.c.b16 %v1810, %v1809
    %v1814 = vpack.c.b16 %v1812, %v1811
    %v1818 = vsel %vm251, %v1791, 0
    %1820 = vmatprep.subr.bf16.mxu0 0
    %1821 = vmatpush1.bf16.msra.mxu0 %v1813
    %1822 = vmatprep.subr.bf16.mxu0 0
    %1823 = vmatpush1.bf16.msra.mxu0 %v1814
    %1824 = vmatprep.subr.bf16.mxu0 0
    %1825 = vmatpush1.bf16.msra.mxu0 0
    %1826 = vmatprep.subr.bf16.mxu0 0
    %1827 = vmatpush1.bf16.msra.mxu0 0
    %1828 = vmatprep.subr.bf16.mxu0 0
    %1829 = vmatpush1.bf16.msra.mxu0 0
    %1830 = vmatprep.subr.bf16.mxu0 0
    %1831 = vmatpush1.bf16.msra.mxu0 0
    %1832 = vmatprep.subr.bf16.mxu0 0
    %1833 = vmatpush1.bf16.msra.mxu0 0
    %1834 = vmatprep.subr.bf16.mxu0 0
    %1835 = vmatpush1.bf16.msra.mxu0 0
    %1836 = vmatprep.subr.bf16.mxu0 0
    %1837 = vmatpush1.bf16.msra.mxu0 0
    %1838 = vmatprep.subr.bf16.mxu0 0
    %1839 = vmatpush1.bf16.msra.mxu0 0
    %1840 = vmatprep.subr.bf16.mxu0 0
    %1841 = vmatpush1.bf16.msra.mxu0 0
    %1842 = vmatprep.subr.bf16.mxu0 0
    %1843 = vmatpush1.bf16.msra.mxu0 0
    %1844 = vmatprep.subr.bf16.mxu0 0
    %1845 = vmatpush1.bf16.msra.mxu0 0
    %1846 = vmatprep.subr.bf16.mxu0 0
    %1847 = vmatpush1.bf16.msra.mxu0 0
    %1848 = vmatprep.subr.bf16.mxu0 0
    %1849 = vmatpush1.bf16.msra.mxu0 0
    %1850 = vmatprep.subr.bf16.mxu0 0
    %1851 = vmatpush1.bf16.msra.mxu0 0
    %1852 = vmatprep.mubr.bf16.mxu0 0
    %1853 = vmatmul.mubr.bf16.gmra.mrb[0].mxu0 %v1818
    %v1854 = vpop.f32.mrb[0].mxu0
    %v1855 = vadd.f32 %v1803, %v1854
    %v1856 = vpop.f32.mrb[0].mxu0
    %v1857 = vpop.f32.mrb[0].mxu0
    %v1858 = vadd.f32 %v1803, %v1857
    %v1859 = vpop.f32.mrb[0].mxu0
    %1860 = vdwg.mxu0
    %v1861 = vmax.f32 %v1855, 0.0
    %v1862 = vmax.f32 %v1858, 0.0
    %v1863 = vpack.c.bf16 %v1862, %v1861
    %s1864 = scalar_lea.vmem [#allocation12], 112
    %v1865 = vld [vmem:[%s1864] sm:$0xf]
    %v1866 = vld [vmem:[%s1864 + $0x4] sm:$0xf]
    %v1867 = vld [vmem:[%s1864 + $0x8] sm:$0xf]
    %v1868 = vld [vmem:[%s1864 + $0xc] sm:$0xf]
    %s1869 = scalar_lea.vmem [#allocation13], 7
    %v1870 = vld [vmem:[%s1869] sm:$0x1]
    %v1872 = vlaneseq
    %v1873 = vshrl.u32 %v1872, 7
    %v1874 = vsub.s32 0, %v1873
    %v1875 = vrot.slane %v1870, %v1874
    %v1881 = vunpack.c.l.b16 %v1865
    %v1882 = vunpack.c.l.b16 %v1866
    %v1883 = vunpack.c.l.b16 %v1867
    %v1884 = vunpack.c.l.b16 %v1868
    %v1885 = vpack.c.b16 %v1882, %v1881
    %v1886 = vpack.c.b16 %v1884, %v1883
    %v1890 = vsel %vm251, %v1863, 0
    %1892 = vmatprep.subr.bf16.mxu0 0
    %1893 = vmatpush1.bf16.msra.mxu0 %v1885
    %1894 = vmatprep.subr.bf16.mxu0 0
    %1895 = vmatpush1.bf16.msra.mxu0 %v1886
    %1896 = vmatprep.subr.bf16.mxu0 0
    %1897 = vmatpush1.bf16.msra.mxu0 0
    %1898 = vmatprep.subr.bf16.mxu0 0
    %1899 = vmatpush1.bf16.msra.mxu0 0
    %1900 = vmatprep.subr.bf16.mxu0 0
    %1901 = vmatpush1.bf16.msra.mxu0 0
    %1902 = vmatprep.subr.bf16.mxu0 0
    %1903 = vmatpush1.bf16.msra.mxu0 0
    %1904 = vmatprep.subr.bf16.mxu0 0
    %1905 = vmatpush1.bf16.msra.mxu0 0
    %1906 = vmatprep.subr.bf16.mxu0 0
    %1907 = vmatpush1.bf16.msra.mxu0 0
    %1908 = vmatprep.subr.bf16.mxu0 0
    %1909 = vmatpush1.bf16.msra.mxu0 0
    %1910 = vmatprep.subr.bf16.mxu0 0
    %1911 = vmatpush1.bf16.msra.mxu0 0
    %1912 = vmatprep.subr.bf16.mxu0 0
    %1913 = vmatpush1.bf16.msra.mxu0 0
    %1914 = vmatprep.subr.bf16.mxu0 0
    %1915 = vmatpush1.bf16.msra.mxu0 0
    %1916 = vmatprep.subr.bf16.mxu0 0
    %1917 = vmatpush1.bf16.msra.mxu0 0
    %1918 = vmatprep.subr.bf16.mxu0 0
    %1919 = vmatpush1.bf16.msra.mxu0 0
    %1920 = vmatprep.subr.bf16.mxu0 0
    %1921 = vmatpush1.bf16.msra.mxu0 0
    %1922 = vmatprep.subr.bf16.mxu0 0
    %1923 = vmatpush1.bf16.msra.mxu0 0
    %1924 = vmatprep.mubr.bf16.mxu0 0
    %1925 = vmatmul.mubr.bf16.gmra.mrb[0].mxu0 %v1890
    %v1926 = vpop.f32.mrb[0].mxu0
    %v1927 = vadd.f32 %v1875, %v1926
    %v1928 = vpop.f32.mrb[0].mxu0
    %v1929 = vpop.f32.mrb[0].mxu0
    %v1930 = vadd.f32 %v1875, %v1929
    %v1931 = vpop.f32.mrb[0].mxu0
    %1932 = vdwg.mxu0
    %v1933 = vmax.f32 %v1927, 0.0
    %v1934 = vmax.f32 %v1930, 0.0
    %v1935 = vadd.f32 %v1487, %v1933
    %v1936 = vadd.f32 %v1488, %v1934
    %v1937 = vpack.c.bf16 %v1936, %v1935
    %v1938 = vld [vmem:[%s7] sm:$0xf]
    %v1939 = vld [vmem:[%s7 + $0x4] sm:$0xf]
    %v1940 = vld [vmem:[%s7 + $0x8] sm:$0xf]
    %v1941 = vld [vmem:[%s7 + $0xc] sm:$0xf]
    %v1942 = vld [vmem:[%s8] sm:$0x1]
    %v1944 = vlaneseq
    %v1945 = vshrl.u32 %v1944, 7
    %v1946 = vsub.s32 0, %v1945
    %v1947 = vrot.slane %v1942, %v1946
    %v1953 = vunpack.c.l.b16 %v1938
    %v1954 = vunpack.c.l.b16 %v1939
    %v1955 = vunpack.c.l.b16 %v1940
    %v1956 = vunpack.c.l.b16 %v1941
    %v1957 = vpack.c.b16 %v1954, %v1953
    %v1958 = vpack.c.b16 %v1956, %v1955
    %v1962 = vsel %vm251, %v1937, 0
    %1964 = vmatprep.subr.bf16.mxu0 0
    %1965 = vmatpush1.bf16.msra.mxu0 %v1957
    %1966 = vmatprep.subr.bf16.mxu0 0
    %1967 = vmatpush1.bf16.msra.mxu0 %v1958
    %1968 = vmatprep.subr.bf16.mxu0 0
    %1969 = vmatpush1.bf16.msra.mxu0 0
    %1970 = vmatprep.subr.bf16.mxu0 0
    %1971 = vmatpush1.bf16.msra.mxu0 0
    %1972 = vmatprep.subr.bf16.mxu0 0
    %1973 = vmatpush1.bf16.msra.mxu0 0
    %1974 = vmatprep.subr.bf16.mxu0 0
    %1975 = vmatpush1.bf16.msra.mxu0 0
    %1976 = vmatprep.subr.bf16.mxu0 0
    %1977 = vmatpush1.bf16.msra.mxu0 0
    %1978 = vmatprep.subr.bf16.mxu0 0
    %1979 = vmatpush1.bf16.msra.mxu0 0
    %1980 = vmatprep.subr.bf16.mxu0 0
    %1981 = vmatpush1.bf16.msra.mxu0 0
    %1982 = vmatprep.subr.bf16.mxu0 0
    %1983 = vmatpush1.bf16.msra.mxu0 0
    %1984 = vmatprep.subr.bf16.mxu0 0
    %1985 = vmatpush1.bf16.msra.mxu0 0
    %1986 = vmatprep.subr.bf16.mxu0 0
    %1987 = vmatpush1.bf16.msra.mxu0 0
    %1988 = vmatprep.subr.bf16.mxu0 0
    %1989 = vmatpush1.bf16.msra.mxu0 0
    %1990 = vmatprep.subr.bf16.mxu0 0
    %1991 = vmatpush1.bf16.msra.mxu0 0
    %1992 = vmatprep.subr.bf16.mxu0 0
    %1993 = vmatpush1.bf16.msra.mxu0 0
    %1994 = vmatprep.subr.bf16.mxu0 0
    %1995 = vmatpush1.bf16.msra.mxu0 0
    %1996 = vmatprep.mubr.bf16.mxu0 0
    %1997 = vmatmul.mubr.bf16.gmra.mrb[0].mxu0 %v1962
    %v1998 = vpop.f32.mrb[0].mxu0
    %v1999 = vadd.f32 %v1947, %v1998
    %v2000 = vpop.f32.mrb[0].mxu0
    %v2001 = vpop.f32.mrb[0].mxu0
    %v2002 = vadd.f32 %v1947, %v2001
    %v2003 = vpop.f32.mrb[0].mxu0
    %2004 = vdwg.mxu0
    %v2005 = vmax.f32 %v1999, 0.0
    %v2006 = vmax.f32 %v2002, 0.0
    %v2007 = vpack.c.bf16 %v2006, %v2005
    %v2008 = vld [vmem:[%s9] sm:$0xf]
    %v2009 = vld [vmem:[%s9 + $0x4] sm:$0xf]
    %v2010 = vld [vmem:[%s9 + $0x8] sm:$0xf]
    %v2011 = vld [vmem:[%s9 + $0xc] sm:$0xf]
    %v2012 = vld [vmem:[%s10] sm:$0x1]
    %v2014 = vlaneseq
    %v2015 = vshrl.u32 %v2014, 7
    %v2016 = vsub.s32 0, %v2015
    %v2017 = vrot.slane %v2012, %v2016
    %v2023 = vunpack.c.l.b16 %v2008
    %v2024 = vunpack.c.l.b16 %v2009
    %v2025 = vunpack.c.l.b16 %v2010
    %v2026 = vunpack.c.l.b16 %v2011
    %v2027 = vpack.c.b16 %v2024, %v2023
    %v2028 = vpack.c.b16 %v2026, %v2025
    %v2032 = vsel %vm251, %v2007, 0
    %2034 = vmatprep.subr.bf16.mxu0 0
    %2035 = vmatpush1.bf16.msra.mxu0 %v2027
    %2036 = vmatprep.subr.bf16.mxu0 0
    %2037 = vmatpush1.bf16.msra.mxu0 %v2028
    %2038 = vmatprep.subr.bf16.mxu0 0
    %2039 = vmatpush1.bf16.msra.mxu0 0
    %2040 = vmatprep.subr.bf16.mxu0 0
    %2041 = vmatpush1.bf16.msra.mxu0 0
    %2042 = vmatprep.subr.bf16.mxu0 0
    %2043 = vmatpush1.bf16.msra.mxu0 0
    %2044 = vmatprep.subr.bf16.mxu0 0
    %2045 = vmatpush1.bf16.msra.mxu0 0
    %2046 = vmatprep.subr.bf16.mxu0 0
    %2047 = vmatpush1.bf16.msra.mxu0 0
    %2048 = vmatprep.subr.bf16.mxu0 0
    %2049 = vmatpush1.bf16.msra.mxu0 0
    %2050 = vmatprep.subr.bf16.mxu0 0
    %2051 = vmatpush1.bf16.msra.mxu0 0
    %2052 = vmatprep.subr.bf16.mxu0 0
    %2053 = vmatpush1.bf16.msra.mxu0 0
    %2054 = vmatprep.subr.bf16.mxu0 0
    %2055 = vmatpush1.bf16.msra.mxu0 0
    %2056 = vmatprep.subr.bf16.mxu0 0
    %2057 = vmatpush1.bf16.msra.mxu0 0
    %2058 = vmatprep.subr.bf16.mxu0 0
    %2059 = vmatpush1.bf16.msra.mxu0 0
    %2060 = vmatprep.subr.bf16.mxu0 0
    %2061 = vmatpush1.bf16.msra.mxu0 0
    %2062 = vmatprep.subr.bf16.mxu0 0
    %2063 = vmatpush1.bf16.msra.mxu0 0
    %2064 = vmatprep.subr.bf16.mxu0 0
    %2065 = vmatpush1.bf16.msra.mxu0 0
    %2066 = vmatprep.mubr.bf16.mxu0 0
    %2067 = vmatmul.mubr.bf16.gmra.mrb[0].mxu0 %v2032
    %v2068 = vpop.f32.mrb[0].mxu0
    %v2069 = vadd.f32 %v2017, %v2068
    %v2070 = vpop.f32.mrb[0].mxu0
    %v2071 = vpop.f32.mrb[0].mxu0
    %v2072 = vadd.f32 %v2017, %v2071
    %v2073 = vpop.f32.mrb[0].mxu0
    %2074 = vdwg.mxu0
    %2075 = vst [vmem:[#allocation15] sm:$0xff] %v2069
    %2076 = vst [vmem:[#allocation15 + $0x8] sm:$0xff] %v2072
    // Predicated region
    $region74: #{skip_gin_net_forward.1} parent=1 // pred_check
      _
    $region75: #{skip_gin_net_forward.1} parent=1 // pred_check_branch
      %2078 = sbr.rel (0) target = $region77
    $region76: #{skip_gin_net_forward.1} parent=1 // pred_region
      %s2080 = ssub.s32 256, 256
      %2081 = vsyncadd [#allocation4], %s2080
      %s2082 = sshll.u32 [#allocation15], 4
      %s2083 = int_to_ptr.vmem [resolvable:$true] %s2082
      %2088 = dma.vmem_to_hbm [thread:$0]  %s2083, 256, %s11, [#allocation4], 128, 128, 8
    $region77: #{skip_gin_net_forward.1} parent=1 // pred_fallthru
      _
    // Predicated region
    $region78: #{skip_gin_net_forward.1} parent=1 // pred_check
      _
    $region79: #{skip_gin_net_forward.1} parent=1 // pred_check_branch
      %2090 = sbr.rel (0) target = $region81
    $region80: #{skip_gin_net_forward.1} parent=1 // pred_region
      %2091 = dma.done [#allocation4], 256
    $region81: #{skip_gin_net_forward.1} parent=1 // pred_fallthru
      _
    %2092 = vsyncpa [#allocation3], 1
    %2093 = vsyncpa [#allocation7], 1
    %2094 = vsyncpa [#allocation11], 1
    %2095 = vsyncpa [#allocation14], 1
    %2096 = vsyncpa [#allocation4], 1
    %2097 = vsyncpa [#allocation5], 1

</llo_original>
